<compile_context>
chip_gen: v5e
topology: v5e:2x2
jax: 0.10.0
libtpu: 0.0.40
codegen_flags: <defaults>
</compile_context>

<pallas_src>
import jax
import jax.numpy as jnp
from jax import lax
from jax.experimental import pallas as pl
from jax.experimental.pallas import tpu as pltpu

LN_EPS = 1e-5      # nn.LayerNorm default
L2_EPS = 1e-12     # F.normalize default


def _mlp(x, w1, w2, w3, b1, g, beta, b2, b3, *, l2):
    """mlp(in, H, 'ntanh', H, 'relu', Z[, 'L2']).  Weights are bf16 (in,out); x/params f32."""
    bf16 = jnp.bfloat16
    h = jnp.dot(x.astype(bf16), w1, preferred_element_type=jnp.float32) + b1
    mean = jnp.mean(h, axis=-1, keepdims=True)
    var = jnp.mean(jnp.square(h - mean), axis=-1, keepdims=True)
    h = (h - mean) * lax.rsqrt(var + LN_EPS) * g + beta
    h = jnp.tanh(h)
    h = jnp.maximum(jnp.dot(h.astype(bf16), w2, preferred_element_type=jnp.float32) + b2, 0.0)
    z = jnp.dot(h.astype(bf16), w3, preferred_element_type=jnp.float32) + b3
    if l2:
        sumsq = jnp.sum(z * z, axis=-1, keepdims=True)
        z = z * lax.rsqrt(jnp.maximum(sumsq, L2_EPS * L2_EPS))   # == z / max(||z||, eps)
    return z


def _svdp_kernel(sa_ref, nobs_ref,
                 fw1_ref, fw2_ref, fw3_ref, mw1_ref, mw2_ref, mw3_ref,
                 vecs_ref, b3s_ref,
                 gmu_ref, gphi_ref, dp_ref, dc_ref):
    vecs = vecs_ref[...]   # (8, H) f32: [fb1, fg, fbeta, fb2, mb1, mg, mbeta, mb2]
    b3s = b3s_ref[...]     # (2, Z) f32: [fb3, mb3]

    # Per-tile MLP forwards; everything is tile-local (no carried state across grid steps).
    phi = _mlp(nobs_ref[...],
               fw1_ref[...], fw2_ref[...], fw3_ref[...],
               vecs[0:1, :], vecs[1:2, :], vecs[2:3, :], vecs[3:4, :],
               b3s[0:1, :], l2=True)                               # (tile_b, Z) f32
    mu = _mlp(sa_ref[...],
              mw1_ref[...], mw2_ref[...], mw3_ref[...],
              vecs[4:5, :], vecs[5:6, :], vecs[6:7, :], vecs[7:8, :],
              b3s[1:2, :], l2=False)                               # (tile_b, Z) f32

    bf16 = jnp.bfloat16
    mu_b = mu.astype(bf16)
    phi_b = phi.astype(bf16)
    # Explicit f32 transpose -> bf16 cast (same rounded values as mu_b/phi_b), so the
    # Gram matmuls stay in plain NN form with K = tile_b (fills the MXU).
    mu_t = mu.T.astype(bf16)      # (Z, tile_b)
    phi_t = phi.T.astype(bf16)    # (Z, tile_b)

    gmu_ref[0] = jnp.dot(mu_t, mu_b, preferred_element_type=jnp.float32)     # (Z, Z)
    gphi_ref[0] = jnp.dot(phi_t, phi_b, preferred_element_type=jnp.float32)  # (Z, Z)

    # Row-wise diagonals of P and Cov on the VPU (bf16-rounded operands, f32 sums) —
    # matches the MXU rounding of the reference's explicit P/Cov diagonals.
    mu_f = mu_b.astype(jnp.float32)
    phi_f = phi_b.astype(jnp.float32)
    dp_ref[...] = jnp.sum(mu_f * phi_f, axis=-1, keepdims=True)    # (tile_b, 1)
    dc_ref[...] = jnp.sum(phi_f * phi_f, axis=-1, keepdims=True)   # (tile_b, 1)


def svdp_loss(obs, action, next_obs, feat_params, mu_params, *, tile_b=None):
    """SVDP.forward loss: one row-tiled ('parallel') Pallas kernel + tiny wrapper reduction."""
    B = obs.shape[0]
    sa = jnp.concatenate([obs, action], axis=1)            # torch.cat([obs, action], dim=1)
    if tile_b is None:
        tile_b = 256 if (B % 256 == 0) else B
    assert B % tile_b == 0 and (tile_b % 8 == 0 or tile_b == B), (B, tile_b)
    n_tiles = B // tile_b

    fw1, fb1, fg, fbeta, fw2, fb2, fw3, fb3 = feat_params
    mw1, mb1, mg, mbeta, mw2, mb2, mw3, mb3 = mu_params
    bf16 = jnp.bfloat16

    # Pack the small per-net vectors into two slabs (fewer DMAs, fewer padded (8,128) tiles).
    vecs = jnp.concatenate([fb1, fg, fbeta, fb2, mb1, mg, mbeta, mb2], axis=0)  # (8, H)
    b3s = jnp.concatenate([fb3, mb3], axis=0)                                    # (2, Z)

    args = (sa, next_obs,
            fw1.astype(bf16), fw2.astype(bf16), fw3.astype(bf16),
            mw1.astype(bf16), mw2.astype(bf16), mw3.astype(bf16),
            vecs, b3s)

    SA = sa.shape[1]
    OBS = next_obs.shape[1]
    Z = fw3.shape[1]

    def const(shape):
        return pl.BlockSpec(shape, lambda i: (0, 0))

    in_specs = [
        pl.BlockSpec((tile_b, SA), lambda i: (i, 0)),    # cat(obs, action): tiled over rows
        pl.BlockSpec((tile_b, OBS), lambda i: (i, 0)),   # next_obs: tiled over rows
        const(fw1.shape), const(fw2.shape), const(fw3.shape),
        const(mw1.shape), const(mw2.shape), const(mw3.shape),
        const(vecs.shape), const(b3s.shape),
    ]

    out_shape = (
        jax.ShapeDtypeStruct((n_tiles, Z, Z), jnp.float32),   # per-tile G_mu
        jax.ShapeDtypeStruct((n_tiles, Z, Z), jnp.float32),   # per-tile G_phi
        jax.ShapeDtypeStruct((B, 1), jnp.float32),            # diag(P)  rows
        jax.ShapeDtypeStruct((B, 1), jnp.float32),            # diag(Cov) rows
    )
    out_specs = (
        pl.BlockSpec((1, Z, Z), lambda i: (i, 0, 0)),
        pl.BlockSpec((1, Z, Z), lambda i: (i, 0, 0)),
        pl.BlockSpec((tile_b, 1), lambda i: (i, 0)),
        pl.BlockSpec((tile_b, 1), lambda i: (i, 0)),
    )

    gmu_t, gphi_t, dp, dc = pl.pallas_call(
        _svdp_kernel,
        out_shape=out_shape,
        grid_spec=pltpu.PrefetchScalarGridSpec(
            num_scalar_prefetch=0,
            grid=(n_tiles,),
            in_specs=in_specs,
            out_specs=out_specs,
        ),
        compiler_params=pltpu.CompilerParams(
            dimension_semantics=("parallel",)),   # tile-local -> both TCs on v7x
    )(*args)

    # Tiny O(Z^2 + B) finalization in XLA.
    gmu = jnp.sum(gmu_t, axis=0)     # (Z, Z) = mu^T mu
    gphi = jnp.sum(gphi_t, axis=0)   # (Z, Z) = phi^T phi
    dp = dp[:, 0]
    dc = dc[:, 0]

    inv_b = 1.0 / B
    inv_off = 1.0 / (B * (B - 1)) if B > 1 else 0.0

    loss = -2.0 * inv_b * (jnp.sum(dp) + jnp.sum(dc))
    loss = loss + inv_off * (jnp.sum(gmu * gphi) - jnp.sum(dp * dp))    # sum(offdiag(P)^2)
    loss = loss + inv_off * (jnp.sum(gphi * gphi) - jnp.sum(dc * dc))   # sum(offdiag(Cov)^2)
    return loss


# ----------------------- parameter construction & pure-JAX reference -----------------------

def _make_mlp_params(key, in_dim, hidden_dim, z_dim):
    ks = jax.random.split(key, 8)
    w1 = jax.random.normal(ks[0], (in_dim, hidden_dim), jnp.float32) / jnp.sqrt(in_dim)
    b1 = 0.1 * jax.random.normal(ks[1], (1, hidden_dim), jnp.float32)
    g = 1.0 + 0.1 * jax.random.normal(ks[2], (1, hidden_dim), jnp.float32)    # LN weight
    beta = 0.1 * jax.random.normal(ks[3], (1, hidden_dim), jnp.float32)       # LN bias
    w2 = jax.random.normal(ks[4], (hidden_dim, hidden_dim), jnp.float32) / jnp.sqrt(hidden_dim)
    b2 = 0.1 * jax.random.normal(ks[5], (1, hidden_dim), jnp.float32)
    w3 = jax.random.normal(ks[6], (hidden_dim, z_dim), jnp.float32) / jnp.sqrt(hidden_dim)
    b3 = 0.1 * jax.random.normal(ks[7], (1, z_dim), jnp.float32)
    return (w1, b1, g, beta, w2, b2, w3, b3)


def _reference_loss(obs, action, next_obs, feat_params, mu_params):
    """Literal SVDP.forward in plain JAX (matmuls use the same bf16-operand / f32-accum
    precision as the kernel's MXU path)."""
    bf16 = jnp.bfloat16

    def mm(a, b):
        return jnp.dot(a.astype(bf16), b.astype(bf16), preferred_element_type=jnp.float32)

    def mlp(x, p, l2):
        w1, b1, g, beta, w2, b2, w3, b3 = p
        h = mm(x, w1) + b1
        mean = h.mean(-1, keepdims=True)
        var = ((h - mean) ** 2).mean(-1, keepdims=True)
        h = jnp.tanh((h - mean) / jnp.sqrt(var + LN_EPS) * g + beta)
        h = jnp.maximum(mm(h, w2) + b2, 0.0)
        z = mm(h, w3) + b3
        if l2:
            z = z / jnp.maximum(jnp.linalg.norm(z, axis=-1, keepdims=True), L2_EPS)
        return z

    phi = mlp(next_obs, feat_params, True)
    mu = mlp(jnp.concatenate([obs, action], axis=1), mu_params, False)

    P = mm(mu, phi.T)
    Cov = mm(phi, phi.T)
    B = P.shape[0]
    eye = jnp.eye(B, dtype=bool)
    loss = -2.0 * jnp.mean(jnp.diagonal(P)) \
        + jnp.sum(jnp.where(eye, 0.0, P) ** 2) / (B * (B - 1))
    loss = loss - 2.0 * jnp.mean(jnp.diagonal(Cov)) \
        + jnp.sum(jnp.where(eye, 0.0, Cov) ** 2) / (B * (B - 1))
    return loss


if __name__ == "__main__":
    B, OBS_DIM, ACT_DIM, HIDDEN, Z_DIM = 16, 32, 8, 64, 16

    key = jax.random.PRNGKey(0)
    k_obs, k_act, k_nobs, k_feat, k_mu = jax.random.split(key, 5)
    obs = jax.random.normal(k_obs, (B, OBS_DIM), jnp.float32)
    action = jax.random.normal(k_act, (B, ACT_DIM), jnp.float32)
    next_obs = jax.random.normal(k_nobs, (B, OBS_DIM), jnp.float32)

    feat_params = _make_mlp_params(k_feat, OBS_DIM, HIDDEN, Z_DIM)
    mu_params = _make_mlp_params(k_mu, OBS_DIM + ACT_DIM, HIDDEN, Z_DIM)

    # tile_b=8 -> 2 grid steps, exercising the per-tile Gram outputs + wrapper reduction.
    loss = svdp_loss(obs, action, next_obs, feat_params, mu_params, tile_b=8)
    loss = jax.block_until_ready(loss)

    ref = _reference_loss(obs, action, next_obs, feat_params, mu_params)
    assert jnp.allclose(loss, ref, atol=1e-2, rtol=1e-2), (loss, ref)

    print("KERNEL_OK")
</pallas_src>

<mosaic_0001>
module attributes {stable_mosaic.version = 11 : i64} {
  func.func @_svdp_kernel(%arg0: i32, %arg1: memref<8x40xf32, #tpu.memory_space<vmem>>, %arg2: memref<8x32xf32, #tpu.memory_space<vmem>>, %arg3: memref<32x64xbf16, #tpu.memory_space<vmem>>, %arg4: memref<64x64xbf16, #tpu.memory_space<vmem>>, %arg5: memref<64x16xbf16, #tpu.memory_space<vmem>>, %arg6: memref<40x64xbf16, #tpu.memory_space<vmem>>, %arg7: memref<64x64xbf16, #tpu.memory_space<vmem>>, %arg8: memref<64x16xbf16, #tpu.memory_space<vmem>>, %arg9: memref<8x64xf32, #tpu.memory_space<vmem>>, %arg10: memref<2x16xf32, #tpu.memory_space<vmem>>, %arg11: memref<1x16x16xf32, #tpu.memory_space<vmem>>, %arg12: memref<1x16x16xf32, #tpu.memory_space<vmem>>, %arg13: memref<8x1xf32, #tpu.memory_space<vmem>>, %arg14: memref<8x1xf32, #tpu.memory_space<vmem>>) attributes {dimension_semantics = [#tpu.dimension_semantics<parallel>], iteration_bounds = array<i64: 2>, scalar_prefetch = 0 : i64, scratch_operands = 0 : i64, tpu.core_type = #tpu.core_type<tc>, window_params = [{transform_indices = @transform_0, window_bounds = array<i64: 8, 40>}, {transform_indices = @transform_1, window_bounds = array<i64: 8, 32>}, {pipeline_mode = #tpu.pipeline_mode<synchronous>, transform_indices = @transform_2, window_bounds = array<i64: 32, 64>}, {pipeline_mode = #tpu.pipeline_mode<synchronous>, transform_indices = @transform_3, window_bounds = array<i64: 64, 64>}, {pipeline_mode = #tpu.pipeline_mode<synchronous>, transform_indices = @transform_4, window_bounds = array<i64: 64, 16>}, {pipeline_mode = #tpu.pipeline_mode<synchronous>, transform_indices = @transform_5, window_bounds = array<i64: 40, 64>}, {pipeline_mode = #tpu.pipeline_mode<synchronous>, transform_indices = @transform_6, window_bounds = array<i64: 64, 64>}, {pipeline_mode = #tpu.pipeline_mode<synchronous>, transform_indices = @transform_7, window_bounds = array<i64: 64, 16>}, {pipeline_mode = #tpu.pipeline_mode<synchronous>, transform_indices = @transform_8, window_bounds = array<i64: 8, 64>}, {pipeline_mode = #tpu.pipeline_mode<synchronous>, transform_indices = @transform_9, window_bounds = array<i64: 2, 16>}, {transform_indices = @transform_10, window_bounds = array<i64: 1, 16, 16>}, {transform_indices = @transform_11, window_bounds = array<i64: 1, 16, 16>}, {transform_indices = @transform_12, window_bounds = array<i64: 8, 1>}, {transform_indices = @transform_13, window_bounds = array<i64: 8, 1>}]} {
    %c0 = arith.constant 0 : index
    %c0_0 = arith.constant 0 : index
    %0 = vector.load %arg9[%c0, %c0_0] : memref<8x64xf32, #tpu.memory_space<vmem>>, vector<8x64xf32>
    %c0_1 = arith.constant 0 : index
    %c0_2 = arith.constant 0 : index
    %1 = vector.load %arg10[%c0_1, %c0_2] : memref<2x16xf32, #tpu.memory_space<vmem>>, vector<2x16xf32>
    %c0_3 = arith.constant 0 : index
    %c0_4 = arith.constant 0 : index
    %2 = vector.load %arg2[%c0_3, %c0_4] : memref<8x32xf32, #tpu.memory_space<vmem>>, vector<8x32xf32>
    %c0_5 = arith.constant 0 : index
    %c0_6 = arith.constant 0 : index
    %3 = vector.load %arg3[%c0_5, %c0_6] : memref<32x64xbf16, #tpu.memory_space<vmem>>, vector<32x64xbf16>
    %c0_7 = arith.constant 0 : index
    %c0_8 = arith.constant 0 : index
    %4 = vector.load %arg4[%c0_7, %c0_8] : memref<64x64xbf16, #tpu.memory_space<vmem>>, vector<64x64xbf16>
    %c0_9 = arith.constant 0 : index
    %c0_10 = arith.constant 0 : index
    %5 = vector.load %arg5[%c0_9, %c0_10] : memref<64x16xbf16, #tpu.memory_space<vmem>>, vector<64x16xbf16>
    %6 = vector.extract_strided_slice %0 {offsets = [0, 0], sizes = [1, 64], strides = [1, 1]} : vector<8x64xf32> to vector<1x64xf32>
    %7 = vector.extract_strided_slice %0 {offsets = [1, 0], sizes = [1, 64], strides = [1, 1]} : vector<8x64xf32> to vector<1x64xf32>
    %8 = vector.extract_strided_slice %0 {offsets = [2, 0], sizes = [1, 64], strides = [1, 1]} : vector<8x64xf32> to vector<1x64xf32>
    %9 = vector.extract_strided_slice %0 {offsets = [3, 0], sizes = [1, 64], strides = [1, 1]} : vector<8x64xf32> to vector<1x64xf32>
    %10 = vector.extract_strided_slice %1 {offsets = [0, 0], sizes = [1, 16], strides = [1, 1]} : vector<2x16xf32> to vector<1x16xf32>
    %11 = arith.truncf %2 : vector<8x32xf32> to vector<8x32xbf16>
    %cst = arith.constant dense<0.000000e+00> : vector<8x64xf32>
    %12 = tpu.matmul %11, %3, %cst {dimension_numbers = #tpu.dot_dimension_numbers<[1], [0], [0], [1], [0, 0, 1, 1], [], []>} : vector<8x32xbf16>, vector<32x64xbf16>, vector<8x64xf32> -> vector<8x64xf32>
    %13 = vector.broadcast %6 : vector<1x64xf32> to vector<8x64xf32>
    %14 = arith.addf %12, %13 : vector<8x64xf32>
    %cst_11 = arith.constant dense<0.000000e+00> : vector<8xf32>
    %15 = vector.multi_reduction <add>, %14, %cst_11 [1] : vector<8x64xf32> to vector<8xf32>
    %16 = vector.shape_cast %15 : vector<8xf32> to vector<8x1xf32>
    %cst_12 = arith.constant 6.400000e+01 : f32
    %17 = vector.broadcast %cst_12 : f32 to vector<8x1xf32>
    %18 = arith.divf %16, %17 : vector<8x1xf32>
    %19 = vector.broadcast %18 : vector<8x1xf32> to vector<8x64xf32>
    %20 = arith.subf %14, %19 : vector<8x64xf32>
    %21 = arith.mulf %20, %20 : vector<8x64xf32>
    %cst_13 = arith.constant dense<0.000000e+00> : vector<8xf32>
    %22 = vector.multi_reduction <add>, %21, %cst_13 [1] : vector<8x64xf32> to vector<8xf32>
    %23 = vector.shape_cast %22 : vector<8xf32> to vector<8x1xf32>
    %cst_14 = arith.constant 6.400000e+01 : f32
    %24 = vector.broadcast %cst_14 : f32 to vector<8x1xf32>
    %25 = arith.divf %23, %24 : vector<8x1xf32>
    %26 = vector.broadcast %18 : vector<8x1xf32> to vector<8x64xf32>
    %27 = arith.subf %14, %26 : vector<8x64xf32>
    %cst_15 = arith.constant 9.99999974E-6 : f32
    %28 = vector.broadcast %cst_15 : f32 to vector<8x1xf32>
    %29 = arith.addf %25, %28 : vector<8x1xf32>
    %30 = math.rsqrt %29 : vector<8x1xf32>
    %31 = vector.broadcast %30 : vector<8x1xf32> to vector<8x64xf32>
    %32 = arith.mulf %27, %31 : vector<8x64xf32>
    %33 = vector.broadcast %7 : vector<1x64xf32> to vector<8x64xf32>
    %34 = arith.mulf %32, %33 : vector<8x64xf32>
    %35 = vector.broadcast %8 : vector<1x64xf32> to vector<8x64xf32>
    %36 = arith.addf %34, %35 : vector<8x64xf32>
    %37 = math.tanh %36 : vector<8x64xf32>
    %38 = arith.truncf %37 : vector<8x64xf32> to vector<8x64xbf16>
    %cst_16 = arith.constant dense<0.000000e+00> : vector<8x64xf32>
    %39 = tpu.matmul %38, %4, %cst_16 {dimension_numbers = #tpu.dot_dimension_numbers<[1], [0], [0], [1], [0, 0, 1, 1], [], []>} : vector<8x64xbf16>, vector<64x64xbf16>, vector<8x64xf32> -> vector<8x64xf32>
    %40 = vector.broadcast %9 : vector<1x64xf32> to vector<8x64xf32>
    %41 = arith.addf %39, %40 : vector<8x64xf32>
    %cst_17 = arith.constant 0.000000e+00 : f32
    %42 = vector.broadcast %cst_17 : f32 to vector<8x64xf32>
    %43 = arith.maximumf %41, %42 : vector<8x64xf32>
    %44 = arith.truncf %43 : vector<8x64xf32> to vector<8x64xbf16>
    %cst_18 = arith.constant dense<0.000000e+00> : vector<8x16xf32>
    %45 = tpu.matmul %44, %5, %cst_18 {dimension_numbers = #tpu.dot_dimension_numbers<[1], [0], [0], [1], [0, 0, 1, 1], [], []>} : vector<8x64xbf16>, vector<64x16xbf16>, vector<8x16xf32> -> vector<8x16xf32>
    %46 = vector.broadcast %10 : vector<1x16xf32> to vector<8x16xf32>
    %47 = arith.addf %45, %46 : vector<8x16xf32>
    %48 = arith.mulf %47, %47 : vector<8x16xf32>
    %cst_19 = arith.constant dense<0.000000e+00> : vector<8xf32>
    %49 = vector.multi_reduction <add>, %48, %cst_19 [1] : vector<8x16xf32> to vector<8xf32>
    %50 = vector.shape_cast %49 : vector<8xf32> to vector<8x1xf32>
    %cst_20 = arith.constant 1.000000e-24 : f32
    %51 = vector.broadcast %cst_20 : f32 to vector<8x1xf32>
    %52 = arith.maximumf %50, %51 : vector<8x1xf32>
    %53 = math.rsqrt %52 : vector<8x1xf32>
    %54 = vector.broadcast %53 : vector<8x1xf32> to vector<8x16xf32>
    %55 = arith.mulf %47, %54 : vector<8x16xf32>
    %c0_21 = arith.constant 0 : index
    %c0_22 = arith.constant 0 : index
    %56 = vector.load %arg1[%c0_21, %c0_22] : memref<8x40xf32, #tpu.memory_space<vmem>>, vector<8x40xf32>
    %c0_23 = arith.constant 0 : index
    %c0_24 = arith.constant 0 : index
    %57 = vector.load %arg6[%c0_23, %c0_24] : memref<40x64xbf16, #tpu.memory_space<vmem>>, vector<40x64xbf16>
    %c0_25 = arith.constant 0 : index
    %c0_26 = arith.constant 0 : index
    %58 = vector.load %arg7[%c0_25, %c0_26] : memref<64x64xbf16, #tpu.memory_space<vmem>>, vector<64x64xbf16>
    %c0_27 = arith.constant 0 : index
    %c0_28 = arith.constant 0 : index
    %59 = vector.load %arg8[%c0_27, %c0_28] : memref<64x16xbf16, #tpu.memory_space<vmem>>, vector<64x16xbf16>
    %60 = vector.extract_strided_slice %0 {offsets = [4, 0], sizes = [1, 64], strides = [1, 1]} : vector<8x64xf32> to vector<1x64xf32>
    %61 = vector.extract_strided_slice %0 {offsets = [5, 0], sizes = [1, 64], strides = [1, 1]} : vector<8x64xf32> to vector<1x64xf32>
    %62 = vector.extract_strided_slice %0 {offsets = [6, 0], sizes = [1, 64], strides = [1, 1]} : vector<8x64xf32> to vector<1x64xf32>
    %63 = vector.extract_strided_slice %0 {offsets = [7, 0], sizes = [1, 64], strides = [1, 1]} : vector<8x64xf32> to vector<1x64xf32>
    %64 = vector.extract_strided_slice %1 {offsets = [1, 0], sizes = [1, 16], strides = [1, 1]} : vector<2x16xf32> to vector<1x16xf32>
    %65 = arith.truncf %56 : vector<8x40xf32> to vector<8x40xbf16>
    %cst_29 = arith.constant dense<0.000000e+00> : vector<8x64xf32>
    %66 = tpu.matmul %65, %57, %cst_29 {dimension_numbers = #tpu.dot_dimension_numbers<[1], [0], [0], [1], [0, 0, 1, 1], [], []>} : vector<8x40xbf16>, vector<40x64xbf16>, vector<8x64xf32> -> vector<8x64xf32>
    %67 = vector.broadcast %60 : vector<1x64xf32> to vector<8x64xf32>
    %68 = arith.addf %66, %67 : vector<8x64xf32>
    %cst_30 = arith.constant dense<0.000000e+00> : vector<8xf32>
    %69 = vector.multi_reduction <add>, %68, %cst_30 [1] : vector<8x64xf32> to vector<8xf32>
    %70 = vector.shape_cast %69 : vector<8xf32> to vector<8x1xf32>
    %cst_31 = arith.constant 6.400000e+01 : f32
    %71 = vector.broadcast %cst_31 : f32 to vector<8x1xf32>
    %72 = arith.divf %70, %71 : vector<8x1xf32>
    %73 = vector.broadcast %72 : vector<8x1xf32> to vector<8x64xf32>
    %74 = arith.subf %68, %73 : vector<8x64xf32>
    %75 = arith.mulf %74, %74 : vector<8x64xf32>
    %cst_32 = arith.constant dense<0.000000e+00> : vector<8xf32>
    %76 = vector.multi_reduction <add>, %75, %cst_32 [1] : vector<8x64xf32> to vector<8xf32>
    %77 = vector.shape_cast %76 : vector<8xf32> to vector<8x1xf32>
    %cst_33 = arith.constant 6.400000e+01 : f32
    %78 = vector.broadcast %cst_33 : f32 to vector<8x1xf32>
    %79 = arith.divf %77, %78 : vector<8x1xf32>
    %80 = vector.broadcast %72 : vector<8x1xf32> to vector<8x64xf32>
    %81 = arith.subf %68, %80 : vector<8x64xf32>
    %cst_34 = arith.constant 9.99999974E-6 : f32
    %82 = vector.broadcast %cst_34 : f32 to vector<8x1xf32>
    %83 = arith.addf %79, %82 : vector<8x1xf32>
    %84 = math.rsqrt %83 : vector<8x1xf32>
    %85 = vector.broadcast %84 : vector<8x1xf32> to vector<8x64xf32>
    %86 = arith.mulf %81, %85 : vector<8x64xf32>
    %87 = vector.broadcast %61 : vector<1x64xf32> to vector<8x64xf32>
    %88 = arith.mulf %86, %87 : vector<8x64xf32>
    %89 = vector.broadcast %62 : vector<1x64xf32> to vector<8x64xf32>
    %90 = arith.addf %88, %89 : vector<8x64xf32>
    %91 = math.tanh %90 : vector<8x64xf32>
    %92 = arith.truncf %91 : vector<8x64xf32> to vector<8x64xbf16>
    %cst_35 = arith.constant dense<0.000000e+00> : vector<8x64xf32>
    %93 = tpu.matmul %92, %58, %cst_35 {dimension_numbers = #tpu.dot_dimension_numbers<[1], [0], [0], [1], [0, 0, 1, 1], [], []>} : vector<8x64xbf16>, vector<64x64xbf16>, vector<8x64xf32> -> vector<8x64xf32>
    %94 = vector.broadcast %63 : vector<1x64xf32> to vector<8x64xf32>
    %95 = arith.addf %93, %94 : vector<8x64xf32>
    %cst_36 = arith.constant 0.000000e+00 : f32
    %96 = vector.broadcast %cst_36 : f32 to vector<8x64xf32>
    %97 = arith.maximumf %95, %96 : vector<8x64xf32>
    %98 = arith.truncf %97 : vector<8x64xf32> to vector<8x64xbf16>
    %cst_37 = arith.constant dense<0.000000e+00> : vector<8x16xf32>
    %99 = tpu.matmul %98, %59, %cst_37 {dimension_numbers = #tpu.dot_dimension_numbers<[1], [0], [0], [1], [0, 0, 1, 1], [], []>} : vector<8x64xbf16>, vector<64x16xbf16>, vector<8x16xf32> -> vector<8x16xf32>
    %100 = vector.broadcast %64 : vector<1x16xf32> to vector<8x16xf32>
    %101 = arith.addf %99, %100 : vector<8x16xf32>
    %102 = arith.truncf %101 : vector<8x16xf32> to vector<8x16xbf16>
    %103 = arith.truncf %55 : vector<8x16xf32> to vector<8x16xbf16>
    %104 = tpu.transpose %101, [1, 0] : vector<8x16xf32> -> vector<16x8xf32>
    %105 = arith.truncf %104 : vector<16x8xf32> to vector<16x8xbf16>
    %106 = tpu.transpose %55, [1, 0] : vector<8x16xf32> -> vector<16x8xf32>
    %107 = arith.truncf %106 : vector<16x8xf32> to vector<16x8xbf16>
    %cst_38 = arith.constant dense<0.000000e+00> : vector<16x16xf32>
    %108 = tpu.matmul %105, %102, %cst_38 {dimension_numbers = #tpu.dot_dimension_numbers<[1], [0], [0], [1], [0, 0, 1, 1], [], []>} : vector<16x8xbf16>, vector<8x16xbf16>, vector<16x16xf32> -> vector<16x16xf32>
    %c0_39 = arith.constant 0 : index
    %c0_40 = arith.constant 0 : index
    %c0_41 = arith.constant 0 : index
    %109 = vector.load %arg11[%c0_39, %c0_40, %c0_41] : memref<1x16x16xf32, #tpu.memory_space<vmem>>, vector<1x16x16xf32>
    %110 = vector.shape_cast %109 : vector<1x16x16xf32> to vector<16x16xf32>
    %111 = vector.shape_cast %108 : vector<16x16xf32> to vector<1x16x16xf32>
    tpu.vector_store %arg11[%c0_39, %c0_40, %c0_41], %111 {strides = array<i32>} : memref<1x16x16xf32, #tpu.memory_space<vmem>>, vector<1x16x16xf32>,
    %cst_42 = arith.constant dense<0.000000e+00> : vector<16x16xf32>
    %112 = tpu.matmul %107, %103, %cst_42 {dimension_numbers = #tpu.dot_dimension_numbers<[1], [0], [0], [1], [0, 0, 1, 1], [], []>} : vector<16x8xbf16>, vector<8x16xbf16>, vector<16x16xf32> -> vector<16x16xf32>
    %c0_43 = arith.constant 0 : index
    %c0_44 = arith.constant 0 : index
    %c0_45 = arith.constant 0 : index
    %113 = vector.load %arg12[%c0_43, %c0_44, %c0_45] : memref<1x16x16xf32, #tpu.memory_space<vmem>>, vector<1x16x16xf32>
    %114 = vector.shape_cast %113 : vector<1x16x16xf32> to vector<16x16xf32>
    %115 = vector.shape_cast %112 : vector<16x16xf32> to vector<1x16x16xf32>
    tpu.vector_store %arg12[%c0_43, %c0_44, %c0_45], %115 {strides = array<i32>} : memref<1x16x16xf32, #tpu.memory_space<vmem>>, vector<1x16x16xf32>,
    %116 = arith.extf %102 : vector<8x16xbf16> to vector<8x16xf32>
    %117 = arith.extf %103 : vector<8x16xbf16> to vector<8x16xf32>
    %118 = arith.mulf %116, %117 : vector<8x16xf32>
    %cst_46 = arith.constant dense<0.000000e+00> : vector<8xf32>
    %119 = vector.multi_reduction <add>, %118, %cst_46 [1] : vector<8x16xf32> to vector<8xf32>
    %120 = vector.shape_cast %119 : vector<8xf32> to vector<8x1xf32>
    %c0_47 = arith.constant 0 : index
    %c0_48 = arith.constant 0 : index
    %121 = vector.load %arg13[%c0_47, %c0_48] : memref<8x1xf32, #tpu.memory_space<vmem>>, vector<8x1xf32>
    tpu.vector_store %arg13[%c0_47, %c0_48], %120 {strides = array<i32>} : memref<8x1xf32, #tpu.memory_space<vmem>>, vector<8x1xf32>,
    %122 = arith.mulf %117, %117 : vector<8x16xf32>
    %cst_49 = arith.constant dense<0.000000e+00> : vector<8xf32>
    %123 = vector.multi_reduction <add>, %122, %cst_49 [1] : vector<8x16xf32> to vector<8xf32>
    %124 = vector.shape_cast %123 : vector<8xf32> to vector<8x1xf32>
    %c0_50 = arith.constant 0 : index
    %c0_51 = arith.constant 0 : index
    %125 = vector.load %arg14[%c0_50, %c0_51] : memref<8x1xf32, #tpu.memory_space<vmem>>, vector<8x1xf32>
    tpu.vector_store %arg14[%c0_50, %c0_51], %124 {strides = array<i32>} : memref<8x1xf32, #tpu.memory_space<vmem>>, vector<8x1xf32>,
    return
  }
  func.func @transform_0(%arg0: i32) -> (i32, i32) {
    %c0_i32 = arith.constant 0 : i32
    %c0_i32_0 = arith.constant 0 : i32
    return %arg0, %c0_i32 : i32, i32
  }
  func.func @transform_1(%arg0: i32) -> (i32, i32) {
    %c0_i32 = arith.constant 0 : i32
    %c0_i32_0 = arith.constant 0 : i32
    return %arg0, %c0_i32 : i32, i32
  }
  func.func @transform_2(%arg0: i32) -> (i32, i32) {
    %c0_i32 = arith.constant 0 : i32
    %c0_i32_0 = arith.constant 0 : i32
    %c0_i32_1 = arith.constant 0 : i32
    return %c0_i32, %c0_i32_0 : i32, i32
  }
  func.func @transform_3(%arg0: i32) -> (i32, i32) {
    %c0_i32 = arith.constant 0 : i32
    %c0_i32_0 = arith.constant 0 : i32
    %c0_i32_1 = arith.constant 0 : i32
    return %c0_i32, %c0_i32_0 : i32, i32
  }
  func.func @transform_4(%arg0: i32) -> (i32, i32) {
    %c0_i32 = arith.constant 0 : i32
    %c0_i32_0 = arith.constant 0 : i32
    %c0_i32_1 = arith.constant 0 : i32
    return %c0_i32, %c0_i32_0 : i32, i32
  }
  func.func @transform_5(%arg0: i32) -> (i32, i32) {
    %c0_i32 = arith.constant 0 : i32
    %c0_i32_0 = arith.constant 0 : i32
    %c0_i32_1 = arith.constant 0 : i32
    return %c0_i32, %c0_i32_0 : i32, i32
  }
  func.func @transform_6(%arg0: i32) -> (i32, i32) {
    %c0_i32 = arith.constant 0 : i32
    %c0_i32_0 = arith.constant 0 : i32
    %c0_i32_1 = arith.constant 0 : i32
    return %c0_i32, %c0_i32_0 : i32, i32
  }
  func.func @transform_7(%arg0: i32) -> (i32, i32) {
    %c0_i32 = arith.constant 0 : i32
    %c0_i32_0 = arith.constant 0 : i32
    %c0_i32_1 = arith.constant 0 : i32
    return %c0_i32, %c0_i32_0 : i32, i32
  }
  func.func @transform_8(%arg0: i32) -> (i32, i32) {
    %c0_i32 = arith.constant 0 : i32
    %c0_i32_0 = arith.constant 0 : i32
    %c0_i32_1 = arith.constant 0 : i32
    return %c0_i32, %c0_i32_0 : i32, i32
  }
  func.func @transform_9(%arg0: i32) -> (i32, i32) {
    %c0_i32 = arith.constant 0 : i32
    %c0_i32_0 = arith.constant 0 : i32
    %c0_i32_1 = arith.constant 0 : i32
    return %c0_i32, %c0_i32_0 : i32, i32
  }
  func.func @transform_10(%arg0: i32) -> (i32, i32, i32) {
    %c0_i32 = arith.constant 0 : i32
    %c0_i32_0 = arith.constant 0 : i32
    %c0_i32_1 = arith.constant 0 : i32
    return %arg0, %c0_i32, %c0_i32_0 : i32, i32, i32
  }
  func.func @transform_11(%arg0: i32) -> (i32, i32, i32) {
    %c0_i32 = arith.constant 0 : i32
    %c0_i32_0 = arith.constant 0 : i32
    %c0_i32_1 = arith.constant 0 : i32
    return %arg0, %c0_i32, %c0_i32_0 : i32, i32, i32
  }
  func.func @transform_12(%arg0: i32) -> (i32, i32) {
    %c0_i32 = arith.constant 0 : i32
    %c0_i32_0 = arith.constant 0 : i32
    return %arg0, %c0_i32 : i32, i32
  }
  func.func @transform_13(%arg0: i32) -> (i32, i32) {
    %c0_i32 = arith.constant 0 : i32
    %c0_i32_0 = arith.constant 0 : i32
    return %arg0, %c0_i32 : i32, i32
  }
}

</mosaic_0001>

<llo_original>
// kernel: tpu_custom_call.1
$region0: #{tpu_custom_call.1}
  #allocation0 [shape = 'u32[]', space=smem, size = 0x4, offset = 0x4, fixed_abs, tag = 'smem constant byte address 0x4 - core index']
  #allocation1 [shape = 'u32[72,128]{1,0:T(1,128)}', space=vmem, size = 0x9000, scoped, tag = 'internal scratch']
  %s0 = inlined_call_operand.hbm [shape: f32[16,40], index: 0, kind: input, shape index: {}]
  %s1 = inlined_call_operand.hbm [shape: f32[16,32], index: 1, kind: input, shape index: {}]
  %s2 = inlined_call_operand.hbm [shape: bf16[32,64], index: 2, kind: input, shape index: {}]
  %s3 = inlined_call_operand.vmem [shape: bf16[64,64], index: 3, kind: input, shape index: {}]
  %s4 = inlined_call_operand.vmem [shape: bf16[64,16], index: 4, kind: input, shape index: {}]
  %s5 = inlined_call_operand.hbm [shape: bf16[40,64], index: 5, kind: input, shape index: {}]
  %s6 = inlined_call_operand.vmem [shape: bf16[64,64], index: 6, kind: input, shape index: {}]
  %s7 = inlined_call_operand.vmem [shape: bf16[64,16], index: 7, kind: input, shape index: {}]
  %s8 = inlined_call_operand.vmem [shape: f32[8,64], index: 8, kind: input, shape index: {}]
  %s9 = inlined_call_operand.vmem [shape: f32[2,16], index: 9, kind: input, shape index: {}]
  %s10 = inlined_call_operand.hbm [shape: f32[2,16,16], index: 10, kind: output, shape index: {0}]
  %s11 = inlined_call_operand.hbm [shape: f32[2,16,16], index: 11, kind: output, shape index: {1}]
  %s12 = inlined_call_operand.vmem [shape: f32[16,1], index: 12, kind: output, shape index: {2}]
  %s13 = inlined_call_operand.vmem [shape: f32[16,1], index: 13, kind: output, shape index: {3}]
  %14 = xla_tuple %s10, %s11, %s12, %s13
  %s15 = sld [smem:[#allocation0]]
  $region113: #{tpu_custom_call.1} parent=0
    _
  %s17 = ssub.s32 1, %s15
  %s18 = scalar_select 0, %s17, %s15
  $region1: #{tpu_custom_call.1} parent=0
    #allocation2 [shape = 'u8[8192]{0}', space=vmem, size = 0x2000, scoped, tag = 'input window, operand 0']
    #allocation3 [shape = 's32[2]{0}', space=sflag, size = 0x8, scoped, tag = 'scoped memory for tpu_custom_call.1']
    #allocation4 [shape = 's32[2]{0}', space=sflag, size = 0x8, scoped, tag = 'scoped memory for tpu_custom_call.1']
    #allocation5 [shape = 'u8[8192]{0}', space=vmem, size = 0x2000, scoped, tag = 'input window, operand 1']
    #allocation6 [shape = 's32[2]{0}', space=sflag, size = 0x8, scoped, tag = 'scoped memory for tpu_custom_call.1']
    #allocation7 [shape = 'u8[8192]{0}', space=vmem, size = 0x2000, scoped, tag = 'input window, operand 2, single buffered']
    #allocation8 [shape = 'u8[10240]{0}', space=vmem, size = 0x2800, scoped, tag = 'input window, operand 5, single buffered']
    #allocation9 [shape = 's32[1]{0}', space=sflag, size = 0x4, scoped, tag = 'scoped memory for tpu_custom_call.1']
    #allocation10 [shape = 'u8[16384]{0}', space=vmem, size = 0x4000, scoped, tag = 'output window, operand 0']
    #allocation11 [shape = 'u8[16384]{0}', space=vmem, size = 0x4000, scoped, tag = 'output window, operand 1']
    #allocation12 [shape = 's32[2]{0}', space=sflag, size = 0x8, scoped, tag = 'scoped memory for tpu_custom_call.1']
    %19 = vsyncpa [#allocation3], 0
    %s20 = scalar_lea.sflag [#allocation3], 1
    %21 = vsyncpa %s20, 0
    %22 = vsyncpa [#allocation6], 0
    %s23 = scalar_lea.sflag [#allocation6], 1
    %24 = vsyncpa %s23, 0
    %25 = vsyncpa [#allocation9], 0
    %26 = vsyncpa [#allocation4], 0
    %s27 = scalar_lea.sflag [#allocation4], 1
    %28 = vsyncpa %s27, 0
    %29 = vsyncpa [#allocation12], 0
    %s30 = scalar_lea.sflag [#allocation12], 1
    %31 = vsyncpa %s30, 0
    loop: start=0, step=1, limit=4
    $region2: #{tpu_custom_call.1} parent=1 // loop_pre_header
      _
    $region3: #{tpu_custom_call.1} parent=1 // loop_header
      %s33 = sphi 0, %s37
      %p34 = scmp.ge.s32.totalorder %s33, 4
      %s43 = sphi 0, %s45
      %s46 = sphi 0, %s43
      %s47 = sphi 0, %s46
      %s63 = sphi 0, %s47
      %s69 = sphi 0, %s71
      %s72 = sphi 0, %s69
      %s73 = sphi 0, %s72
      %s89 = sphi 0, %s73
      %s93 = sphi 0, %s93
      %s95 = sphi 0, %s93
      %s96 = sphi 0, %s95
      %s110 = sphi 0, %s96
      %s114 = sphi 0, %s114
      %s116 = sphi 0, %s114
      %s117 = sphi 0, %s116
      %s131 = sphi 0, %s117
      %s135 = sphi 0, %s135
      %s137 = sphi 0, %s135
      %s138 = sphi 0, %s137
      %s152 = sphi 0, %s138
      %s156 = sphi 0, %s156
      %s158 = sphi 0, %s156
      %s159 = sphi 0, %s158
      %s173 = sphi 0, %s159
      %s177 = sphi 0, %s177
      %s179 = sphi 0, %s177
      %s180 = sphi 0, %s179
      %s194 = sphi 0, %s180
      %s198 = sphi 0, %s198
      %s200 = sphi 0, %s198
      %s201 = sphi 0, %s200
      %s215 = sphi 0, %s201
      %s219 = sphi 0, %s219
      %s221 = sphi 0, %s219
      %s222 = sphi 0, %s221
      %s236 = sphi 0, %s222
      %s240 = sphi 0, %s240
      %s242 = sphi 0, %s240
      %s243 = sphi 0, %s242
      %s257 = sphi 0, %s243
      %s263 = sphi 0, %s265
      %s266 = sphi 0, %s263
      %s267 = sphi 0, %s266
      %s283 = sphi 0, %s267
      %s289 = sphi 0, %s291
      %s292 = sphi 0, %s289
      %s293 = sphi 0, %s292
      %s309 = sphi 0, %s293
      %s315 = sphi 0, %s317
      %s318 = sphi 0, %s315
      %s319 = sphi 0, %s318
      %s335 = sphi 0, %s319
      %s341 = sphi 0, %s343
      %s344 = sphi 0, %s341
      %s345 = sphi 0, %s344
      %s361 = sphi 0, %s345
    $region4: #{tpu_custom_call.1} parent=1 // loop_header_branch
      %36 = sbr.rel (%p34) target = $region8
    $region5: #{tpu_custom_call.1} parent=1 // loop_body
      %s38 = ssub.s32 %s33, 1
      %s39 = ssub.s32 %s33, 2
      %s40 = sadd.s32 %s33, 1
      %s41 = ssub.s32 %s33, %s40
      %p42 = scmp.eq.s32.totalorder %s41, 0
      %s44 = sadd.s32 %s43, 1
      %s45 = scalar_select %p42, %s43, %s44
      %p48 = pneg %p42
      %p49 = scmp.eq.s32.totalorder %s33, 1
      %p50 = por %p48, %p49
      %p51 = scmp.ne.s32.totalorder %s43, %s46
      %p52 = scmp.eq.s32.totalorder %s33, 0
      %p53 = por %p51, %p52
      %p54 = scmp.ne.s32.totalorder %s43, %s46
      %p55 = scmp.eq.s32.totalorder %s38, 1
      %p56 = por %p54, %p55
      %p57 = scmp.ne.s32.totalorder %s46, %s47
      %p58 = scmp.eq.s32.totalorder %s38, 0
      %p59 = por %p57, %p58
      %p60 = scmp.ne.s32.totalorder %s46, %s47
      %p61 = scmp.eq.s32.totalorder %s39, 1
      %p62 = por %p60, %p61
      %p64 = scmp.ne.s32.totalorder %s47, %s63
      %p65 = scmp.eq.s32.totalorder %s39, 0
      %p66 = por %p64, %p65
      %s67 = ssub.s32 %s33, %s40
      %p68 = scmp.eq.s32.totalorder %s67, 0
      %s70 = sadd.s32 %s69, 1
      %s71 = scalar_select %p68, %s69, %s70
      %p74 = pneg %p68
      %p75 = scmp.eq.s32.totalorder %s33, 1
      %p76 = por %p74, %p75
      %p77 = scmp.ne.s32.totalorder %s69, %s72
      %p78 = scmp.eq.s32.totalorder %s33, 0
      %p79 = por %p77, %p78
      %p80 = scmp.ne.s32.totalorder %s69, %s72
      %p81 = scmp.eq.s32.totalorder %s38, 1
      %p82 = por %p80, %p81
      %p83 = scmp.ne.s32.totalorder %s72, %s73
      %p84 = scmp.eq.s32.totalorder %s38, 0
      %p85 = por %p83, %p84
      %p86 = scmp.ne.s32.totalorder %s72, %s73
      %p87 = scmp.eq.s32.totalorder %s39, 1
      %p88 = por %p86, %p87
      %p90 = scmp.ne.s32.totalorder %s73, %s89
      %p91 = scmp.eq.s32.totalorder %s39, 0
      %p92 = por %p90, %p91
      %s94 = sadd.s32 %s93, 1
      %p97 = scmp.eq.s32.totalorder %s33, 1
      %p98 = scmp.ne.s32.totalorder %s93, %s95
      %p99 = scmp.eq.s32.totalorder %s33, 0
      %p100 = por %p98, %p99
      %p101 = scmp.ne.s32.totalorder %s93, %s95
      %p102 = scmp.eq.s32.totalorder %s38, 1
      %p103 = por %p101, %p102
      %p104 = scmp.ne.s32.totalorder %s95, %s96
      %p105 = scmp.eq.s32.totalorder %s38, 0
      %p106 = por %p104, %p105
      %p107 = scmp.ne.s32.totalorder %s95, %s96
      %p108 = scmp.eq.s32.totalorder %s39, 1
      %p109 = por %p107, %p108
      %p111 = scmp.ne.s32.totalorder %s96, %s110
      %p112 = scmp.eq.s32.totalorder %s39, 0
      %p113 = por %p111, %p112
      %s115 = sadd.s32 %s114, 1
      %p118 = scmp.eq.s32.totalorder %s33, 1
      %p119 = scmp.ne.s32.totalorder %s114, %s116
      %p120 = scmp.eq.s32.totalorder %s33, 0
      %p121 = por %p119, %p120
      %p122 = scmp.ne.s32.totalorder %s114, %s116
      %p123 = scmp.eq.s32.totalorder %s38, 1
      %p124 = por %p122, %p123
      %p125 = scmp.ne.s32.totalorder %s116, %s117
      %p126 = scmp.eq.s32.totalorder %s38, 0
      %p127 = por %p125, %p126
      %p128 = scmp.ne.s32.totalorder %s116, %s117
      %p129 = scmp.eq.s32.totalorder %s39, 1
      %p130 = por %p128, %p129
      %p132 = scmp.ne.s32.totalorder %s117, %s131
      %p133 = scmp.eq.s32.totalorder %s39, 0
      %p134 = por %p132, %p133
      %s136 = sadd.s32 %s135, 1
      %p139 = scmp.eq.s32.totalorder %s33, 1
      %p140 = scmp.ne.s32.totalorder %s135, %s137
      %p141 = scmp.eq.s32.totalorder %s33, 0
      %p142 = por %p140, %p141
      %p143 = scmp.ne.s32.totalorder %s135, %s137
      %p144 = scmp.eq.s32.totalorder %s38, 1
      %p145 = por %p143, %p144
      %p146 = scmp.ne.s32.totalorder %s137, %s138
      %p147 = scmp.eq.s32.totalorder %s38, 0
      %p148 = por %p146, %p147
      %p149 = scmp.ne.s32.totalorder %s137, %s138
      %p150 = scmp.eq.s32.totalorder %s39, 1
      %p151 = por %p149, %p150
      %p153 = scmp.ne.s32.totalorder %s138, %s152
      %p154 = scmp.eq.s32.totalorder %s39, 0
      %p155 = por %p153, %p154
      %s157 = sadd.s32 %s156, 1
      %p160 = scmp.eq.s32.totalorder %s33, 1
      %p161 = scmp.ne.s32.totalorder %s156, %s158
      %p162 = scmp.eq.s32.totalorder %s33, 0
      %p163 = por %p161, %p162
      %p164 = scmp.ne.s32.totalorder %s156, %s158
      %p165 = scmp.eq.s32.totalorder %s38, 1
      %p166 = por %p164, %p165
      %p167 = scmp.ne.s32.totalorder %s158, %s159
      %p168 = scmp.eq.s32.totalorder %s38, 0
      %p169 = por %p167, %p168
      %p170 = scmp.ne.s32.totalorder %s158, %s159
      %p171 = scmp.eq.s32.totalorder %s39, 1
      %p172 = por %p170, %p171
      %p174 = scmp.ne.s32.totalorder %s159, %s173
      %p175 = scmp.eq.s32.totalorder %s39, 0
      %p176 = por %p174, %p175
      %s178 = sadd.s32 %s177, 1
      %p181 = scmp.eq.s32.totalorder %s33, 1
      %p182 = scmp.ne.s32.totalorder %s177, %s179
      %p183 = scmp.eq.s32.totalorder %s33, 0
      %p184 = por %p182, %p183
      %p185 = scmp.ne.s32.totalorder %s177, %s179
      %p186 = scmp.eq.s32.totalorder %s38, 1
      %p187 = por %p185, %p186
      %p188 = scmp.ne.s32.totalorder %s179, %s180
      %p189 = scmp.eq.s32.totalorder %s38, 0
      %p190 = por %p188, %p189
      %p191 = scmp.ne.s32.totalorder %s179, %s180
      %p192 = scmp.eq.s32.totalorder %s39, 1
      %p193 = por %p191, %p192
      %p195 = scmp.ne.s32.totalorder %s180, %s194
      %p196 = scmp.eq.s32.totalorder %s39, 0
      %p197 = por %p195, %p196
      %s199 = sadd.s32 %s198, 1
      %p202 = scmp.eq.s32.totalorder %s33, 1
      %p203 = scmp.ne.s32.totalorder %s198, %s200
      %p204 = scmp.eq.s32.totalorder %s33, 0
      %p205 = por %p203, %p204
      %p206 = scmp.ne.s32.totalorder %s198, %s200
      %p207 = scmp.eq.s32.totalorder %s38, 1
      %p208 = por %p206, %p207
      %p209 = scmp.ne.s32.totalorder %s200, %s201
      %p210 = scmp.eq.s32.totalorder %s38, 0
      %p211 = por %p209, %p210
      %p212 = scmp.ne.s32.totalorder %s200, %s201
      %p213 = scmp.eq.s32.totalorder %s39, 1
      %p214 = por %p212, %p213
      %p216 = scmp.ne.s32.totalorder %s201, %s215
      %p217 = scmp.eq.s32.totalorder %s39, 0
      %p218 = por %p216, %p217
      %s220 = sadd.s32 %s219, 1
      %p223 = scmp.eq.s32.totalorder %s33, 1
      %p224 = scmp.ne.s32.totalorder %s219, %s221
      %p225 = scmp.eq.s32.totalorder %s33, 0
      %p226 = por %p224, %p225
      %p227 = scmp.ne.s32.totalorder %s219, %s221
      %p228 = scmp.eq.s32.totalorder %s38, 1
      %p229 = por %p227, %p228
      %p230 = scmp.ne.s32.totalorder %s221, %s222
      %p231 = scmp.eq.s32.totalorder %s38, 0
      %p232 = por %p230, %p231
      %p233 = scmp.ne.s32.totalorder %s221, %s222
      %p234 = scmp.eq.s32.totalorder %s39, 1
      %p235 = por %p233, %p234
      %p237 = scmp.ne.s32.totalorder %s222, %s236
      %p238 = scmp.eq.s32.totalorder %s39, 0
      %p239 = por %p237, %p238
      %s241 = sadd.s32 %s240, 1
      %p244 = scmp.eq.s32.totalorder %s33, 1
      %p245 = scmp.ne.s32.totalorder %s240, %s242
      %p246 = scmp.eq.s32.totalorder %s33, 0
      %p247 = por %p245, %p246
      %p248 = scmp.ne.s32.totalorder %s240, %s242
      %p249 = scmp.eq.s32.totalorder %s38, 1
      %p250 = por %p248, %p249
      %p251 = scmp.ne.s32.totalorder %s242, %s243
      %p252 = scmp.eq.s32.totalorder %s38, 0
      %p253 = por %p251, %p252
      %p254 = scmp.ne.s32.totalorder %s242, %s243
      %p255 = scmp.eq.s32.totalorder %s39, 1
      %p256 = por %p254, %p255
      %p258 = scmp.ne.s32.totalorder %s243, %s257
      %p259 = scmp.eq.s32.totalorder %s39, 0
      %p260 = por %p258, %p259
      %s261 = ssub.s32 %s33, %s40
      %p262 = scmp.eq.s32.totalorder %s261, 0
      %s264 = sadd.s32 %s263, 1
      %s265 = scalar_select %p262, %s263, %s264
      %p268 = pneg %p262
      %p269 = scmp.eq.s32.totalorder %s33, 1
      %p270 = por %p268, %p269
      %p271 = scmp.ne.s32.totalorder %s263, %s266
      %p272 = scmp.eq.s32.totalorder %s33, 0
      %p273 = por %p271, %p272
      %p274 = scmp.ne.s32.totalorder %s263, %s266
      %p275 = scmp.eq.s32.totalorder %s38, 1
      %p276 = por %p274, %p275
      %p277 = scmp.ne.s32.totalorder %s266, %s267
      %p278 = scmp.eq.s32.totalorder %s38, 0
      %p279 = por %p277, %p278
      %p280 = scmp.ne.s32.totalorder %s266, %s267
      %p281 = scmp.eq.s32.totalorder %s39, 1
      %p282 = por %p280, %p281
      %p284 = scmp.ne.s32.totalorder %s267, %s283
      %p285 = scmp.eq.s32.totalorder %s39, 0
      %p286 = por %p284, %p285
      %s287 = ssub.s32 %s33, %s40
      %p288 = scmp.eq.s32.totalorder %s287, 0
      %s290 = sadd.s32 %s289, 1
      %s291 = scalar_select %p288, %s289, %s290
      %p294 = pneg %p288
      %p295 = scmp.eq.s32.totalorder %s33, 1
      %p296 = por %p294, %p295
      %p297 = scmp.ne.s32.totalorder %s289, %s292
      %p298 = scmp.eq.s32.totalorder %s33, 0
      %p299 = por %p297, %p298
      %p300 = scmp.ne.s32.totalorder %s289, %s292
      %p301 = scmp.eq.s32.totalorder %s38, 1
      %p302 = por %p300, %p301
      %p303 = scmp.ne.s32.totalorder %s292, %s293
      %p304 = scmp.eq.s32.totalorder %s38, 0
      %p305 = por %p303, %p304
      %p306 = scmp.ne.s32.totalorder %s292, %s293
      %p307 = scmp.eq.s32.totalorder %s39, 1
      %p308 = por %p306, %p307
      %p310 = scmp.ne.s32.totalorder %s293, %s309
      %p311 = scmp.eq.s32.totalorder %s39, 0
      %p312 = por %p310, %p311
      %s313 = ssub.s32 %s33, %s40
      %p314 = scmp.eq.s32.totalorder %s313, 0
      %s316 = sadd.s32 %s315, 1
      %s317 = scalar_select %p314, %s315, %s316
      %p320 = pneg %p314
      %p321 = scmp.eq.s32.totalorder %s33, 1
      %p322 = por %p320, %p321
      %p323 = scmp.ne.s32.totalorder %s315, %s318
      %p324 = scmp.eq.s32.totalorder %s33, 0
      %p325 = por %p323, %p324
      %p326 = scmp.ne.s32.totalorder %s315, %s318
      %p327 = scmp.eq.s32.totalorder %s38, 1
      %p328 = por %p326, %p327
      %p329 = scmp.ne.s32.totalorder %s318, %s319
      %p330 = scmp.eq.s32.totalorder %s38, 0
      %p331 = por %p329, %p330
      %p332 = scmp.ne.s32.totalorder %s318, %s319
      %p333 = scmp.eq.s32.totalorder %s39, 1
      %p334 = por %p332, %p333
      %p336 = scmp.ne.s32.totalorder %s319, %s335
      %p337 = scmp.eq.s32.totalorder %s39, 0
      %p338 = por %p336, %p337
      %s339 = ssub.s32 %s33, %s40
      %p340 = scmp.eq.s32.totalorder %s339, 0
      %s342 = sadd.s32 %s341, 1
      %s343 = scalar_select %p340, %s341, %s342
      %p346 = pneg %p340
      %p347 = scmp.eq.s32.totalorder %s33, 1
      %p348 = por %p346, %p347
      %p349 = scmp.ne.s32.totalorder %s341, %s344
      %p350 = scmp.eq.s32.totalorder %s33, 0
      %p351 = por %p349, %p350
      %p352 = scmp.ne.s32.totalorder %s341, %s344
      %p353 = scmp.eq.s32.totalorder %s38, 1
      %p354 = por %p352, %p353
      %p355 = scmp.ne.s32.totalorder %s344, %s345
      %p356 = scmp.eq.s32.totalorder %s38, 0
      %p357 = por %p355, %p356
      %p358 = scmp.ne.s32.totalorder %s344, %s345
      %p359 = scmp.eq.s32.totalorder %s39, 1
      %p360 = por %p358, %p359
      %p362 = scmp.ne.s32.totalorder %s345, %s361
      %p363 = scmp.eq.s32.totalorder %s39, 0
      %p364 = por %p362, %p363
      %p365 = scmp.le.s32.totalorder 1, %s33
      %p366 = scmp.lt.s32.totalorder %s33, 3
      %p367 = pnand %p365, %p366
      %p368 = pneg %p367
      // Predicated region
      $region9: #{tpu_custom_call.1} parent=5 // pred_check
        _
      $region10: #{tpu_custom_call.1} parent=5 // pred_check_branch
        %370 = sbr.rel (%p367) target = $region12
      $region11: #{tpu_custom_call.1} parent=5 // pred_region
        %s371 = ssub.s32 %s33, 1
        // Predicated region
        $region13: #{tpu_custom_call.1} parent=11 // pred_check
          %p372 = pneg %p106
        $region14: #{tpu_custom_call.1} parent=11 // pred_check_branch
          %374 = sbr.rel (%p372) target = $region16
        $region15: #{tpu_custom_call.1} parent=11 // pred_region
          %376 = vsyncadd [#allocation6], 0
          %s377 = sshll.u32 %s2, 4
          %s378 = int_to_ptr.hbm [resolvable:$true] %s377
          %s379 = sshll.u32 [#allocation7], 4
          %s380 = int_to_ptr.vmem [resolvable:$true] %s379
          %385 = dma.hbm_to_vmem [thread:$0]  %s378, 256, %s380, [#allocation6], 64, 64, 4
        $region16: #{tpu_custom_call.1} parent=11 // pred_fallthru
          _
        // Predicated region
        $region17: #{tpu_custom_call.1} parent=11 // pred_check
          %p386 = pneg %p127
        $region18: #{tpu_custom_call.1} parent=11 // pred_check_branch
          %388 = sbr.rel (%p386) target = $region20
        $region19: #{tpu_custom_call.1} parent=11 // pred_region
          _
        $region20: #{tpu_custom_call.1} parent=11 // pred_fallthru
          _
        // Predicated region
        $region21: #{tpu_custom_call.1} parent=11 // pred_check
          %p389 = pneg %p148
        $region22: #{tpu_custom_call.1} parent=11 // pred_check_branch
          %391 = sbr.rel (%p389) target = $region24
        $region23: #{tpu_custom_call.1} parent=11 // pred_region
          _
        $region24: #{tpu_custom_call.1} parent=11 // pred_fallthru
          _
        // Predicated region
        $region25: #{tpu_custom_call.1} parent=11 // pred_check
          %p392 = pneg %p169
        $region26: #{tpu_custom_call.1} parent=11 // pred_check_branch
          %394 = sbr.rel (%p392) target = $region28
        $region27: #{tpu_custom_call.1} parent=11 // pred_region
          %396 = vsyncadd [#allocation9], 0
          %s397 = sshll.u32 %s5, 4
          %s398 = int_to_ptr.hbm [resolvable:$true] %s397
          %s399 = sshll.u32 [#allocation8], 4
          %s400 = int_to_ptr.vmem [resolvable:$true] %s399
          %405 = dma.hbm_to_vmem [thread:$0]  %s398, 320, %s400, [#allocation9], 64, 64, 4
        $region28: #{tpu_custom_call.1} parent=11 // pred_fallthru
          _
        // Predicated region
        $region29: #{tpu_custom_call.1} parent=11 // pred_check
          %p406 = pneg %p190
        $region30: #{tpu_custom_call.1} parent=11 // pred_check_branch
          %408 = sbr.rel (%p406) target = $region32
        $region31: #{tpu_custom_call.1} parent=11 // pred_region
          _
        $region32: #{tpu_custom_call.1} parent=11 // pred_fallthru
          _
        // Predicated region
        $region33: #{tpu_custom_call.1} parent=11 // pred_check
          %p409 = pneg %p211
        $region34: #{tpu_custom_call.1} parent=11 // pred_check_branch
          %411 = sbr.rel (%p409) target = $region36
        $region35: #{tpu_custom_call.1} parent=11 // pred_region
          _
        $region36: #{tpu_custom_call.1} parent=11 // pred_fallthru
          _
        // Predicated region
        $region37: #{tpu_custom_call.1} parent=11 // pred_check
          %p412 = pneg %p232
        $region38: #{tpu_custom_call.1} parent=11 // pred_check_branch
          %414 = sbr.rel (%p412) target = $region40
        $region39: #{tpu_custom_call.1} parent=11 // pred_region
          _
        $region40: #{tpu_custom_call.1} parent=11 // pred_fallthru
          _
        // Predicated region
        $region41: #{tpu_custom_call.1} parent=11 // pred_check
          %p415 = pneg %p253
        $region42: #{tpu_custom_call.1} parent=11 // pred_check_branch
          %417 = sbr.rel (%p415) target = $region44
        $region43: #{tpu_custom_call.1} parent=11 // pred_region
          _
        $region44: #{tpu_custom_call.1} parent=11 // pred_fallthru
          _
      $region12: #{tpu_custom_call.1} parent=5 // pred_fallthru
        _
      %p418 = scmp.lt.s32.totalorder %s33, 2
      // Predicated region
      $region45: #{tpu_custom_call.1} parent=5 // pred_check
        %p419 = pneg %p418
      $region46: #{tpu_custom_call.1} parent=5 // pred_check_branch
        %421 = sbr.rel (%p419) target = $region48
      $region47: #{tpu_custom_call.1} parent=5 // pred_region
        // Predicated region
        $region49: #{tpu_custom_call.1} parent=47 // pred_check
          %p422 = pneg %p53
        $region50: #{tpu_custom_call.1} parent=47 // pred_check_branch
          %424 = sbr.rel (%p422) target = $region52
        $region51: #{tpu_custom_call.1} parent=47 // pred_region
          %s425 = sand.u32 %s43, 1
          %s426 = scalar_lea.sflag [#allocation3], %s425
          %s427 = sand.u32 %s43, 1
          %s428 = smul.addr %s427, 8
          %s429 = scalar_lea.vmem [#allocation2], %s428
          %431 = vsyncadd %s426, 0
          %s432 = smul.addr %s33, 8
          %s433 = scalar_lea.hbm %s0, %s432
          %s435 = sshll.u32 %s433, 4
          %s436 = int_to_ptr.hbm [resolvable:$true] %s435
          %s437 = sshll.u32 %s429, 4
          %s438 = int_to_ptr.vmem [resolvable:$true] %s437
          %440 = dma.hbm_to_vmem [thread:$0]  %s436, 128, %s438, %s426
        $region52: #{tpu_custom_call.1} parent=47 // pred_fallthru
          _
        // Predicated region
        $region53: #{tpu_custom_call.1} parent=47 // pred_check
          %p441 = pneg %p79
        $region54: #{tpu_custom_call.1} parent=47 // pred_check_branch
          %443 = sbr.rel (%p441) target = $region56
        $region55: #{tpu_custom_call.1} parent=47 // pred_region
          %s444 = sand.u32 %s33, 1
          %s445 = scalar_lea.sflag [#allocation6], %s444
          %s446 = sand.u32 %s69, 1
          %s447 = smul.addr %s446, 8
          %s448 = scalar_lea.vmem [#allocation5], %s447
          %450 = vsyncadd %s445, 0
          %s451 = smul.addr %s33, 8
          %s452 = scalar_lea.hbm %s1, %s451
          %s454 = sshll.u32 %s452, 4
          %s455 = int_to_ptr.hbm [resolvable:$true] %s454
          %s456 = sshll.u32 %s448, 4
          %s457 = int_to_ptr.vmem [resolvable:$true] %s456
          %459 = dma.hbm_to_vmem [thread:$0]  %s455, 128, %s457, %s445
        $region56: #{tpu_custom_call.1} parent=47 // pred_fallthru
          _
      $region48: #{tpu_custom_call.1} parent=5 // pred_fallthru
        _
      %p460 = scmp.le.s32.totalorder 1, %s33
      %p461 = scmp.lt.s32.totalorder %s33, 3
      %p462 = pnand %p460, %p461
      %p463 = pneg %p462
      // Predicated region
      $region57: #{tpu_custom_call.1} parent=5 // pred_check
        _
      $region58: #{tpu_custom_call.1} parent=5 // pred_check_branch
        %465 = sbr.rel (%p462) target = $region60
      $region59: #{tpu_custom_call.1} parent=5 // pred_region
        %s466 = ssub.s32 %s33, 1
        %s467 = sand.u32 %s46, 1
        %s468 = scalar_lea.sflag [#allocation3], %s467
        %s469 = sand.u32 %s46, 1
        %s470 = smul.addr %s469, 8
        %s471 = scalar_lea.vmem [#allocation2], %s470
        // Predicated region
        $region61: #{tpu_custom_call.1} parent=59 // pred_check
          %p472 = pneg %p59
        $region62: #{tpu_custom_call.1} parent=59 // pred_check_branch
          %474 = sbr.rel (%p472) target = $region64
        $region63: #{tpu_custom_call.1} parent=59 // pred_region
          %476 = dma.done %s468, 128
        $region64: #{tpu_custom_call.1} parent=59 // pred_fallthru
          _
        %s477 = sand.u32 %s38, 1
        %s478 = scalar_lea.sflag [#allocation6], %s477
        %s479 = sand.u32 %s72, 1
        %s480 = smul.addr %s479, 8
        %s481 = scalar_lea.vmem [#allocation5], %s480
        // Predicated region
        $region65: #{tpu_custom_call.1} parent=59 // pred_check
          %p482 = pneg %p85
        $region66: #{tpu_custom_call.1} parent=59 // pred_check_branch
          %484 = sbr.rel (%p482) target = $region68
        $region67: #{tpu_custom_call.1} parent=59 // pred_region
          %486 = dma.done %s478, 128
        $region68: #{tpu_custom_call.1} parent=59 // pred_fallthru
          _
        // Predicated region
        $region69: #{tpu_custom_call.1} parent=59 // pred_check
          %p487 = pneg %p106
        $region70: #{tpu_custom_call.1} parent=59 // pred_check_branch
          %489 = sbr.rel (%p487) target = $region72
        $region71: #{tpu_custom_call.1} parent=59 // pred_region
          %491 = dma.done [#allocation6], 256
        $region72: #{tpu_custom_call.1} parent=59 // pred_fallthru
          _
        // Predicated region
        $region73: #{tpu_custom_call.1} parent=59 // pred_check
          %p492 = pneg %p169
        $region74: #{tpu_custom_call.1} parent=59 // pred_check_branch
          %494 = sbr.rel (%p492) target = $region76
        $region75: #{tpu_custom_call.1} parent=59 // pred_region
          %496 = dma.done [#allocation9], 320
        $region76: #{tpu_custom_call.1} parent=59 // pred_fallthru
          _
        %s497 = sand.u32 %s46, 1
        %s498 = scalar_lea.sflag [#allocation3], %s497
        %s499 = sand.u32 %s46, 1
        %s500 = smul.addr %s499, 8
        %s501 = scalar_lea.vmem [#allocation2], %s500
        %p502 = pneg %p59
        %p503 = pneg %p56
        %s504 = sand.u32 %s38, 1
        %s505 = scalar_lea.sflag [#allocation6], %s504
        %s506 = sand.u32 %s72, 1
        %s507 = smul.addr %s506, 8
        %s508 = scalar_lea.vmem [#allocation5], %s507
        %p509 = pneg %p85
        %p510 = pneg %p82
        %p511 = pneg %p106
        %p512 = pneg %p103
        %p513 = pneg %p127
        %p514 = pneg %p124
        %p515 = pneg %p148
        %p516 = pneg %p145
        %p517 = pneg %p169
        %p518 = pneg %p166
        %p519 = pneg %p190
        %p520 = pneg %p187
        %p521 = pneg %p211
        %p522 = pneg %p208
        %p523 = pneg %p232
        %p524 = pneg %p229
        %p525 = pneg %p253
        %p526 = pneg %p250
        %p527 = pneg %p279
        %p528 = pneg %p276
        %s529 = sand.u32 %s266, 1
        %s530 = scalar_lea.sflag [#allocation4], %s529
        %s531 = sand.u32 %s266, 1
        %s532 = smul.addr %s531, 16
        %s533 = scalar_lea.vmem [#allocation10], %s532
        %p534 = pneg %p305
        %p535 = pneg %p302
        %s536 = sand.u32 %s292, 1
        %s537 = scalar_lea.sflag [#allocation12], %s536
        %s538 = sand.u32 %s292, 1
        %s539 = smul.addr %s538, 16
        %s540 = scalar_lea.vmem [#allocation11], %s539
        %p541 = pneg %p331
        %p542 = pneg %p328
        %p543 = scmp.lt.s32.totalorder %s38, 1
        %s544 = scalar_select %p543, %s38, 1
        %s545 = smul.addr %s544, 8
        %s546 = scalar_lea.vmem %s12, %s545
        %p547 = pneg %p357
        %p548 = pneg %p354
        %p549 = scmp.lt.s32.totalorder %s38, 1
        %s550 = scalar_select %p549, %s38, 1
        %s551 = smul.addr %s550, 8
        %s552 = scalar_lea.vmem %s13, %s551
        %p553 = scmp.lt.s32.totalorder %s38, 1
        %s554 = scalar_select %p553, %s38, 1
        %s555 = smul.addr %s554, 8
        %s556 = scalar_lea.vmem %s12, %s555
        %p557 = scmp.lt.s32.totalorder %s38, 1
        %s558 = scalar_select %p557, %s38, 1
        %s559 = smul.addr %s558, 8
        %s560 = scalar_lea.vmem %s13, %s559
        %v562 = vld [vmem:[%s8] sm:$0xff]
        %v563 = vld [vmem:[%s9] sm:$0x3]
        %v564 = vld [vmem:[%s481] sm:$0xff]
        %v565 = vld [vmem:[#allocation7] sm:$0xf]
        %v566 = vld [vmem:[#allocation7 + $0x4] sm:$0xf]
        %v567 = vld [vmem:[#allocation7 + $0x8] sm:$0xf]
        %v568 = vld [vmem:[#allocation7 + $0xc] sm:$0xf]
        %v569 = vld [vmem:[%s3] sm:$0xf]
        %v570 = vld [vmem:[%s3 + $0x4] sm:$0xf]
        %v571 = vld [vmem:[%s3 + $0x8] sm:$0xf]
        %v572 = vld [vmem:[%s3 + $0xc] sm:$0xf]
        %v573 = vld [vmem:[%s3 + $0x10] sm:$0xf]
        %v574 = vld [vmem:[%s3 + $0x14] sm:$0xf]
        %v575 = vld [vmem:[%s3 + $0x18] sm:$0xf]
        %v576 = vld [vmem:[%s3 + $0x1c] sm:$0xf]
        %v577 = vld [vmem:[%s4] sm:$0xf]
        %v578 = vld [vmem:[%s4 + $0x4] sm:$0xf]
        %v579 = vld [vmem:[%s4 + $0x8] sm:$0xf]
        %v580 = vld [vmem:[%s4 + $0xc] sm:$0xf]
        %v581 = vld [vmem:[%s4 + $0x10] sm:$0xf]
        %v582 = vld [vmem:[%s4 + $0x14] sm:$0xf]
        %v583 = vld [vmem:[%s4 + $0x18] sm:$0xf]
        %v584 = vld [vmem:[%s4 + $0x1c] sm:$0xf]
        %v585 = vpack.c.bf16 %v564, %v564
        %v586 = vperm.slane %v562, 0
        %v591 = vunpack.c.l.b16 %v565
        %v592 = vunpack.c.l.b16 %v566
        %v593 = vunpack.c.l.b16 %v567
        %v594 = vunpack.c.l.b16 %v568
        %v595 = vpack.c.b16 %v592, %v591
        %v596 = vpack.c.b16 %v594, %v593
        %vm599 = vcmask 261120
        %v601 = vsel %vm599, %v585, 0
        %603 = vmatpush.bf16.msra.mxu0 0
        %604 = vmatpush.bf16.msra.mxu0 0
        %605 = vmatpush.bf16.msra.mxu0 0
        %606 = vmatpush.bf16.msra.mxu0 0
        %607 = vmatpush.bf16.msra.mxu0 0
        %608 = vmatpush.bf16.msra.mxu0 0
        %609 = vmatpush.bf16.msra.mxu0 %v596
        %610 = vmatpush.bf16.msra.mxu0 %v595
        %611 = vmatmul.bf16.gmra.mxu0 %v601
        %v612 = vpop.f32.mrf.mxu0
        %v613 = vadd.f32 %v586, %v612
        %v614 = vpop.f32.mrf.mxu0
        %615 = vdwg.mxu0
        %vm616 = vcmask 523264
        %v617 = vsel %vm616, %v613, 0.0
        %618 = vadd.xlane.f32.xlu0 %v617
        %v619 = vpop.xlane.xlu0 %618
        %v620 = vrcp.pop 64.0
        %v621 = vmul.f32 64.0, %v620
        %v622 = vsub.f32 1.0, %v621
        %v623 = vmul.f32 %v620, %v622
        %v624 = vadd.f32 %v620, %v623
        %vm625 = vweird.f32 %v620
        %v626 = vsel %vm625, %v620, %v624
        %v627 = vmul.f32 %v619, %v626
        %v628 = vsub.f32 %v613, %v627
        %v629 = vmul.f32 %v628, %v628
        %v630 = vsel %vm616, %v629, 0.0
        %631 = vadd.xlane.f32.xlu0 %v630
        %v632 = vpop.xlane.xlu0 %631
        %v633 = vmul.f32 %v632, %v626
        %v634 = vadd.f32 %v633, 1e-05
        %v635 = vrsqrt.pop %v634
        %v636 = vmul.f32 %v635, %v634
        %v637 = vmul.f32 %v636, %v635
        %v638 = vmul.f32 0.5, %v637
        %v639 = vsub.f32 1.5, %v638
        %v640 = vmul.f32 %v635, %v639
        %vm641 = vweird.f32 %v634
        %vm642 = vweird.f32 %v635
        %vm643 = vmor %vm641, %vm642
        %v644 = vsel %vm643, %v635, %v640
        %v645 = vmul.f32 %v628, %v644
        %v646 = vperm.slane %v562, 1
        %v647 = vmul.f32 %v645, %v646
        %v648 = vperm.slane %v562, 2
        %v649 = vadd.f32 %v647, %v648
        %v650 = vtanh.pop %v649
        %v651 = vpack.c.bf16 %v650, %v650
        %v652 = vperm.slane %v562, 3
        %v661 = vunpack.c.l.b16 %v569
        %v662 = vunpack.c.l.b16 %v570
        %v663 = vunpack.c.l.b16 %v571
        %v664 = vunpack.c.l.b16 %v572
        %v665 = vunpack.c.l.b16 %v573
        %v666 = vunpack.c.l.b16 %v574
        %v667 = vunpack.c.l.b16 %v575
        %v668 = vunpack.c.l.b16 %v576
        %v669 = vpack.c.b16 %v662, %v661
        %v670 = vpack.c.b16 %v664, %v663
        %v671 = vpack.c.b16 %v666, %v665
        %v672 = vpack.c.b16 %v668, %v667
        %v678 = vsel %vm616, %v651, 0
        %680 = vmatpush.bf16.msra.mxu0 0
        %681 = vmatpush.bf16.msra.mxu0 0
        %682 = vmatpush.bf16.msra.mxu0 0
        %683 = vmatpush.bf16.msra.mxu0 0
        %684 = vmatpush.bf16.msra.mxu0 %v672
        %685 = vmatpush.bf16.msra.mxu0 %v671
        %686 = vmatpush.bf16.msra.mxu0 %v670
        %687 = vmatpush.bf16.msra.mxu0 %v669
        %688 = vmatmul.bf16.gmra.mxu0 %v678
        %v689 = vpop.f32.mrf.mxu0
        %v690 = vadd.f32 %v652, %v689
        %v691 = vpop.f32.mrf.mxu0
        %692 = vdwg.mxu0
        %v693 = vmax.f32 %v690, 0.0
        %v694 = vpack.c.bf16 %v693, %v693
        %v695 = vperm.slane %v563, 0
        %v704 = vunpack.c.l.b16 %v577
        %v705 = vunpack.c.l.b16 %v578
        %v706 = vunpack.c.l.b16 %v579
        %v707 = vunpack.c.l.b16 %v580
        %v708 = vunpack.c.l.b16 %v581
        %v709 = vunpack.c.l.b16 %v582
        %v710 = vunpack.c.l.b16 %v583
        %v711 = vunpack.c.l.b16 %v584
        %v712 = vpack.c.b16 %v705, %v704
        %v713 = vpack.c.b16 %v707, %v706
        %v714 = vpack.c.b16 %v709, %v708
        %v715 = vpack.c.b16 %v711, %v710
        %v721 = vsel %vm616, %v694, 0
        %723 = vmatpush.bf16.msra.mxu0 0
        %724 = vmatpush.bf16.msra.mxu0 0
        %725 = vmatpush.bf16.msra.mxu0 0
        %726 = vmatpush.bf16.msra.mxu0 0
        %727 = vmatpush.bf16.msra.mxu0 %v715
        %728 = vmatpush.bf16.msra.mxu0 %v714
        %729 = vmatpush.bf16.msra.mxu0 %v713
        %730 = vmatpush.bf16.msra.mxu0 %v712
        %731 = vmatmul.bf16.gmra.mxu0 %v721
        %v732 = vpop.f32.mrf.mxu0
        %v733 = vadd.f32 %v695, %v732
        %v734 = vpop.f32.mrf.mxu0
        %735 = vdwg.mxu0
        %v736 = vmul.f32 %v733, %v733
        %vm737 = vcmask 130048
        %v738 = vsel %vm737, %v736, 0.0
        %739 = vadd.xlane.f32.xlu0 %v738
        %v740 = vpop.xlane.xlu0 %739
        %v741 = vmax.f32 %v740, 1e-24
        %v742 = vrsqrt.pop %v741
        %v743 = vmul.f32 %v742, %v741
        %v744 = vmul.f32 %v743, %v742
        %v745 = vmul.f32 0.5, %v744
        %v746 = vsub.f32 1.5, %v745
        %v747 = vmul.f32 %v742, %v746
        %vm748 = vweird.f32 %v741
        %vm749 = vweird.f32 %v742
        %vm750 = vmor %vm748, %vm749
        %v751 = vsel %vm750, %v742, %v747
        %v752 = vmul.f32 %v733, %v751
        %v753 = vld [vmem:[%s471] sm:$0xff]
        %v754 = vld [vmem:[#allocation8] sm:$0xf]
        %v755 = vld [vmem:[#allocation8 + $0x4] sm:$0xf]
        %v756 = vld [vmem:[#allocation8 + $0x8] sm:$0xf]
        %v757 = vld [vmem:[#allocation8 + $0xc] sm:$0xf]
        %v758 = vld [vmem:[#allocation8 + $0x10] sm:$0xf]
        %v759 = vld [vmem:[%s6] sm:$0xf]
        %v760 = vld [vmem:[%s6 + $0x4] sm:$0xf]
        %v761 = vld [vmem:[%s6 + $0x8] sm:$0xf]
        %v762 = vld [vmem:[%s6 + $0xc] sm:$0xf]
        %v763 = vld [vmem:[%s6 + $0x10] sm:$0xf]
        %v764 = vld [vmem:[%s6 + $0x14] sm:$0xf]
        %v765 = vld [vmem:[%s6 + $0x18] sm:$0xf]
        %v766 = vld [vmem:[%s6 + $0x1c] sm:$0xf]
        %v767 = vld [vmem:[%s7] sm:$0xf]
        %v768 = vld [vmem:[%s7 + $0x4] sm:$0xf]
        %v769 = vld [vmem:[%s7 + $0x8] sm:$0xf]
        %v770 = vld [vmem:[%s7 + $0xc] sm:$0xf]
        %v771 = vld [vmem:[%s7 + $0x10] sm:$0xf]
        %v772 = vld [vmem:[%s7 + $0x14] sm:$0xf]
        %v773 = vld [vmem:[%s7 + $0x18] sm:$0xf]
        %v774 = vld [vmem:[%s7 + $0x1c] sm:$0xf]
        %v775 = vpack.c.bf16 %v753, %v753
        %v776 = vperm.slane %v562, 4
        %v782 = vunpack.c.l.b16 %v754
        %v783 = vunpack.c.l.b16 %v755
        %v784 = vunpack.c.l.b16 %v756
        %v785 = vunpack.c.l.b16 %v757
        %v786 = vunpack.c.l.b16 %v758
        %v787 = vpack.c.b16 %v783, %v782
        %v788 = vpack.c.b16 %v785, %v784
        %v789 = vpack.c.b16 %v786, %v786
        %vm792 = vcmask 326656
        %v794 = vsel %vm792, %v775, 0
        %vm796 = vcmask 1043456
        %v798 = vsel %vm796, %v789, 0
        %800 = vmatpush.bf16.msra.mxu0 0
        %801 = vmatpush.bf16.msra.mxu0 0
        %802 = vmatpush.bf16.msra.mxu0 0
        %803 = vmatpush.bf16.msra.mxu0 0
        %804 = vmatpush.bf16.msra.mxu0 0
        %805 = vmatpush.bf16.msra.mxu0 %v798
        %806 = vmatpush.bf16.msra.mxu0 %v788
        %807 = vmatpush.bf16.msra.mxu0 %v787
        %808 = vmatmul.bf16.gmra.mxu0 %v794
        %v809 = vpop.f32.mrf.mxu0
        %v810 = vadd.f32 %v776, %v809
        %v811 = vpop.f32.mrf.mxu0
        %812 = vdwg.mxu0
        %v813 = vsel %vm616, %v810, 0.0
        %814 = vadd.xlane.f32.xlu0 %v813
        %v815 = vpop.xlane.xlu0 %814
        %v816 = vmul.f32 %v815, %v626
        %v817 = vsub.f32 %v810, %v816
        %v818 = vmul.f32 %v817, %v817
        %v819 = vsel %vm616, %v818, 0.0
        %820 = vadd.xlane.f32.xlu0 %v819
        %v821 = vpop.xlane.xlu0 %820
        %v822 = vmul.f32 %v821, %v626
        %v823 = vadd.f32 %v822, 1e-05
        %v824 = vrsqrt.pop %v823
        %v825 = vmul.f32 %v824, %v823
        %v826 = vmul.f32 %v825, %v824
        %v827 = vmul.f32 0.5, %v826
        %v828 = vsub.f32 1.5, %v827
        %v829 = vmul.f32 %v824, %v828
        %vm830 = vweird.f32 %v823
        %vm831 = vweird.f32 %v824
        %vm832 = vmor %vm830, %vm831
        %v833 = vsel %vm832, %v824, %v829
        %v834 = vmul.f32 %v817, %v833
        %v835 = vperm.slane %v562, 5
        %v836 = vmul.f32 %v834, %v835
        %v837 = vperm.slane %v562, 6
        %v838 = vadd.f32 %v836, %v837
        %v839 = vtanh.pop %v838
        %v840 = vpack.c.bf16 %v839, %v839
        %v841 = vperm.slane %v562, 7
        %v850 = vunpack.c.l.b16 %v759
        %v851 = vunpack.c.l.b16 %v760
        %v852 = vunpack.c.l.b16 %v761
        %v853 = vunpack.c.l.b16 %v762
        %v854 = vunpack.c.l.b16 %v763
        %v855 = vunpack.c.l.b16 %v764
        %v856 = vunpack.c.l.b16 %v765
        %v857 = vunpack.c.l.b16 %v766
        %v858 = vpack.c.b16 %v851, %v850
        %v859 = vpack.c.b16 %v853, %v852
        %v860 = vpack.c.b16 %v855, %v854
        %v861 = vpack.c.b16 %v857, %v856
        %v867 = vsel %vm616, %v840, 0
        %869 = vmatpush.bf16.msra.mxu0 0
        %870 = vmatpush.bf16.msra.mxu0 0
        %871 = vmatpush.bf16.msra.mxu0 0
        %872 = vmatpush.bf16.msra.mxu0 0
        %873 = vmatpush.bf16.msra.mxu0 %v861
        %874 = vmatpush.bf16.msra.mxu0 %v860
        %875 = vmatpush.bf16.msra.mxu0 %v859
        %876 = vmatpush.bf16.msra.mxu0 %v858
        %877 = vmatmul.bf16.gmra.mxu0 %v867
        %v878 = vpop.f32.mrf.mxu0
        %v879 = vadd.f32 %v841, %v878
        %v880 = vpop.f32.mrf.mxu0
        %881 = vdwg.mxu0
        %v882 = vmax.f32 %v879, 0.0
        %v883 = vpack.c.bf16 %v882, %v882
        %v884 = vperm.slane %v563, 1
        %v893 = vunpack.c.l.b16 %v767
        %v894 = vunpack.c.l.b16 %v768
        %v895 = vunpack.c.l.b16 %v769
        %v896 = vunpack.c.l.b16 %v770
        %v897 = vunpack.c.l.b16 %v771
        %v898 = vunpack.c.l.b16 %v772
        %v899 = vunpack.c.l.b16 %v773
        %v900 = vunpack.c.l.b16 %v774
        %v901 = vpack.c.b16 %v894, %v893
        %v902 = vpack.c.b16 %v896, %v895
        %v903 = vpack.c.b16 %v898, %v897
        %v904 = vpack.c.b16 %v900, %v899
        %v910 = vsel %vm616, %v883, 0
        %912 = vmatpush.bf16.msra.mxu0 0
        %913 = vmatpush.bf16.msra.mxu0 0
        %914 = vmatpush.bf16.msra.mxu0 0
        %915 = vmatpush.bf16.msra.mxu0 0
        %916 = vmatpush.bf16.msra.mxu0 %v904
        %917 = vmatpush.bf16.msra.mxu0 %v903
        %918 = vmatpush.bf16.msra.mxu0 %v902
        %919 = vmatpush.bf16.msra.mxu0 %v901
        %920 = vmatmul.bf16.gmra.mxu0 %v910
        %v921 = vpop.f32.mrf.mxu0
        %v922 = vadd.f32 %v884, %v921
        %v923 = vpop.f32.mrf.mxu0
        %924 = vdwg.mxu0
        %v925 = vpack.c.bf16 %v922, %v922
        %v926 = vpack.c.bf16 %v752, %v752
        %927 = vxpose.xlu0.b32.start [1/16] %v922, 128
        %928 = vxpose.xlu0.b32.cont [2/16] 0.0, 128
        %929 = vxpose.xlu0.b32.cont [3/16] 0.0, 128
        %930 = vxpose.xlu0.b32.cont [4/16] 0.0, 128
        %931 = vxpose.xlu0.b32.cont [5/16] 0.0, 128
        %932 = vxpose.xlu0.b32.cont [6/16] 0.0, 128
        %933 = vxpose.xlu0.b32.cont [7/16] 0.0, 128
        %934 = vxpose.xlu0.b32.cont [8/16] 0.0, 128
        %935 = vxpose.xlu0.b32.cont [9/16] 0.0, 128
        %936 = vxpose.xlu0.b32.cont [10/16] 0.0, 128
        %937 = vxpose.xlu0.b32.cont [11/16] 0.0, 128
        %938 = vxpose.xlu0.b32.cont [12/16] 0.0, 128
        %939 = vxpose.xlu0.b32.cont [13/16] 0.0, 128
        %940 = vxpose.xlu0.b32.cont [14/16] 0.0, 128
        %941 = vxpose.xlu0.b32.cont [15/16] 0.0, 128
        %942 = vxpose.xlu0.b32.end [16/16] 0.0, 128
        %v943 = vpop.trf.xlu0
        %v944 = vpop.trf.xlu0
        %v945 = vpop.trf.xlu0
        %v946 = vpop.trf.xlu0
        %v947 = vpop.trf.xlu0
        %v948 = vpop.trf.xlu0
        %v949 = vpop.trf.xlu0
        %v950 = vpop.trf.xlu0
        %v951 = vpop.trf.xlu0
        %v952 = vpop.trf.xlu0
        %v953 = vpop.trf.xlu0
        %v954 = vpop.trf.xlu0
        %v955 = vpop.trf.xlu0
        %v956 = vpop.trf.xlu0
        %v957 = vpop.trf.xlu0
        %v958 = vpop.trf.xlu0
        %v959 = vpack.c.bf16 %v944, %v943
        %960 = vxpose.xlu0.b32.start [1/16] %v752, 128
        %961 = vxpose.xlu0.b32.cont [2/16] 0.0, 128
        %962 = vxpose.xlu0.b32.cont [3/16] 0.0, 128
        %963 = vxpose.xlu0.b32.cont [4/16] 0.0, 128
        %964 = vxpose.xlu0.b32.cont [5/16] 0.0, 128
        %965 = vxpose.xlu0.b32.cont [6/16] 0.0, 128
        %966 = vxpose.xlu0.b32.cont [7/16] 0.0, 128
        %967 = vxpose.xlu0.b32.cont [8/16] 0.0, 128
        %968 = vxpose.xlu0.b32.cont [9/16] 0.0, 128
        %969 = vxpose.xlu0.b32.cont [10/16] 0.0, 128
        %970 = vxpose.xlu0.b32.cont [11/16] 0.0, 128
        %971 = vxpose.xlu0.b32.cont [12/16] 0.0, 128
        %972 = vxpose.xlu0.b32.cont [13/16] 0.0, 128
        %973 = vxpose.xlu0.b32.cont [14/16] 0.0, 128
        %974 = vxpose.xlu0.b32.cont [15/16] 0.0, 128
        %975 = vxpose.xlu0.b32.end [16/16] 0.0, 128
        %v976 = vpop.trf.xlu0
        %v977 = vpop.trf.xlu0
        %v978 = vpop.trf.xlu0
        %v979 = vpop.trf.xlu0
        %v980 = vpop.trf.xlu0
        %v981 = vpop.trf.xlu0
        %v982 = vpop.trf.xlu0
        %v983 = vpop.trf.xlu0
        %v984 = vpop.trf.xlu0
        %v985 = vpop.trf.xlu0
        %v986 = vpop.trf.xlu0
        %v987 = vpop.trf.xlu0
        %v988 = vpop.trf.xlu0
        %v989 = vpop.trf.xlu0
        %v990 = vpop.trf.xlu0
        %v991 = vpop.trf.xlu0
        %v992 = vpack.c.bf16 %v977, %v976
        %vm993 = vcmask 64512
        %v995 = vsel %vm993, %v959, 0
        %v998 = vsel %vm796, %v925, 0
        %1000 = vmatpush.bf16.msra.mxu0 0
        %1001 = vmatpush.bf16.msra.mxu0 0
        %1002 = vmatpush.bf16.msra.mxu0 0
        %1003 = vmatpush.bf16.msra.mxu0 0
        %1004 = vmatpush.bf16.msra.mxu0 0
        %1005 = vmatpush.bf16.msra.mxu0 0
        %1006 = vmatpush.bf16.msra.mxu0 0
        %1007 = vmatpush.bf16.msra.mxu0 %v998
        %1008 = vmatmul.bf16.gmra.mxu0 %v995
        %v1009 = vpop.f32.mrf.mxu0
        %v1010 = vadd.f32 0.0, %v1009
        %v1011 = vpop.f32.mrf.mxu0
        %v1012 = vadd.f32 0.0, %v1011
        %1013 = vdwg.mxu0
        %1014 = vst.msk [vmem:[%s533] sm:$0xff] %vm737, %v1010
        %1015 = vst.msk [vmem:[%s533 + $0x8] sm:$0xff] %vm737, %v1012
        %v1017 = vsel %vm993, %v992, 0
        %v1020 = vsel %vm796, %v926, 0
        %1022 = vmatpush.bf16.msra.mxu0 0
        %1023 = vmatpush.bf16.msra.mxu0 0
        %1024 = vmatpush.bf16.msra.mxu0 0
        %1025 = vmatpush.bf16.msra.mxu0 0
        %1026 = vmatpush.bf16.msra.mxu0 0
        %1027 = vmatpush.bf16.msra.mxu0 0
        %1028 = vmatpush.bf16.msra.mxu0 0
        %1029 = vmatpush.bf16.msra.mxu0 %v1020
        %1030 = vmatmul.bf16.gmra.mxu0 %v1017
        %v1031 = vpop.f32.mrf.mxu0
        %v1032 = vadd.f32 0.0, %v1031
        %v1033 = vpop.f32.mrf.mxu0
        %v1034 = vadd.f32 0.0, %v1033
        %1035 = vdwg.mxu0
        %1036 = vst.msk [vmem:[%s540] sm:$0xff] %vm737, %v1032
        %1037 = vst.msk [vmem:[%s540 + $0x8] sm:$0xff] %vm737, %v1034
        %v1038 = vunpack.c.l.bf16 %v925
        %v1039 = vunpack.c.l.bf16 %v926
        %v1040 = vmul.f32 %v1038, %v1039
        %v1041 = vsel %vm737, %v1040, 0.0
        %1042 = vadd.xlane.f32.xlu0 %v1041
        %v1043 = vpop.xlane.xlu0 %1042
        %vm1044 = vcmask 7168
        %1045 = vst.msk [vmem:[%s556] sm:$0xff] %vm1044, %v1043
        %v1046 = vmul.f32 %v1039, %v1039
        %v1047 = vsel %vm737, %v1046, 0.0
        %1048 = vadd.xlane.f32.xlu0 %v1047
        %v1049 = vpop.xlane.xlu0 %1048
        %1050 = vst.msk [vmem:[%s560] sm:$0xff] %vm1044, %v1049
        %s1051 = sand.u32 %s266, 1
        %s1052 = scalar_lea.sflag [#allocation4], %s1051
        %s1053 = sand.u32 %s266, 1
        %s1054 = smul.addr %s1053, 16
        %s1055 = scalar_lea.vmem [#allocation10], %s1054
        %s1056 = sand.u32 %s292, 1
        %s1057 = scalar_lea.sflag [#allocation12], %s1056
        %s1058 = sand.u32 %s292, 1
        %s1059 = smul.addr %s1058, 16
        %s1060 = scalar_lea.vmem [#allocation11], %s1059
        %p1061 = scmp.lt.s32.totalorder %s38, 1
        %s1062 = scalar_select %p1061, %s38, 1
        %s1063 = smul.addr %s1062, 8
        %s1064 = scalar_lea.vmem %s12, %s1063
        %p1065 = scmp.lt.s32.totalorder %s38, 1
        %s1066 = scalar_select %p1065, %s38, 1
        %s1067 = smul.addr %s1066, 8
        %s1068 = scalar_lea.vmem %s13, %s1067
        // Predicated region
        $region77: #{tpu_custom_call.1} parent=59 // pred_check
          %p1069 = pneg %p276
        $region78: #{tpu_custom_call.1} parent=59 // pred_check_branch
          %1071 = sbr.rel (%p1069) target = $region80
        $region79: #{tpu_custom_call.1} parent=59 // pred_region
          %1073 = vsyncadd %s1052, 0
          %s1074 = smul.addr %s38, 2
          %s1075 = smul.addr %s1074, 8
          %s1076 = scalar_lea.hbm %s10, %s1075
          %s1077 = sshll.u32 %s1055, 4
          %s1078 = int_to_ptr.vmem [resolvable:$true] %s1077
          %s1079 = sshll.u32 %s1076, 4
          %s1080 = int_to_ptr.hbm [resolvable:$true] %s1079
          %1085 = dma.vmem_to_hbm [thread:$0]  %s1078, 256, %s1080, %s1052, 128, 128, 8
        $region80: #{tpu_custom_call.1} parent=59 // pred_fallthru
          _
        // Predicated region
        $region81: #{tpu_custom_call.1} parent=59 // pred_check
          %p1086 = pneg %p302
        $region82: #{tpu_custom_call.1} parent=59 // pred_check_branch
          %1088 = sbr.rel (%p1086) target = $region84
        $region83: #{tpu_custom_call.1} parent=59 // pred_region
          %1090 = vsyncadd %s1057, 0
          %s1091 = smul.addr %s38, 2
          %s1092 = smul.addr %s1091, 8
          %s1093 = scalar_lea.hbm %s11, %s1092
          %s1094 = sshll.u32 %s1060, 4
          %s1095 = int_to_ptr.vmem [resolvable:$true] %s1094
          %s1096 = sshll.u32 %s1093, 4
          %s1097 = int_to_ptr.hbm [resolvable:$true] %s1096
          %1102 = dma.vmem_to_hbm [thread:$0]  %s1095, 256, %s1097, %s1057, 128, 128, 8
        $region84: #{tpu_custom_call.1} parent=59 // pred_fallthru
          _
        // Predicated region
        $region85: #{tpu_custom_call.1} parent=59 // pred_check
          %p1103 = pneg %p328
        $region86: #{tpu_custom_call.1} parent=59 // pred_check_branch
          %1105 = sbr.rel (%p1103) target = $region88
        $region87: #{tpu_custom_call.1} parent=59 // pred_region
          _
        $region88: #{tpu_custom_call.1} parent=59 // pred_fallthru
          _
        // Predicated region
        $region89: #{tpu_custom_call.1} parent=59 // pred_check
          %p1106 = pneg %p354
        $region90: #{tpu_custom_call.1} parent=59 // pred_check_branch
          %1108 = sbr.rel (%p1106) target = $region92
        $region91: #{tpu_custom_call.1} parent=59 // pred_region
          _
        $region92: #{tpu_custom_call.1} parent=59 // pred_fallthru
          _
      $region60: #{tpu_custom_call.1} parent=5 // pred_fallthru
        _
      %p1109 = scmp.le.s32.totalorder 2, %s33
      // Predicated region
      $region93: #{tpu_custom_call.1} parent=5 // pred_check
        %p1110 = pneg %p1109
      $region94: #{tpu_custom_call.1} parent=5 // pred_check_branch
        %1112 = sbr.rel (%p1110) target = $region96
      $region95: #{tpu_custom_call.1} parent=5 // pred_region
        %s1113 = ssub.s32 %s33, 2
        // Predicated region
        $region97: #{tpu_custom_call.1} parent=95 // pred_check
          %p1114 = pneg %p282
        $region98: #{tpu_custom_call.1} parent=95 // pred_check_branch
          %1116 = sbr.rel (%p1114) target = $region100
        $region99: #{tpu_custom_call.1} parent=95 // pred_region
          %s1117 = sand.u32 %s267, 1
          %s1118 = scalar_lea.sflag [#allocation4], %s1117
          %s1119 = sand.u32 %s267, 1
          %s1120 = smul.addr %s1119, 16
          %s1121 = scalar_lea.vmem [#allocation10], %s1120
          %1123 = dma.done %s1118, 256
        $region100: #{tpu_custom_call.1} parent=95 // pred_fallthru
          _
        // Predicated region
        $region101: #{tpu_custom_call.1} parent=95 // pred_check
          %p1124 = pneg %p308
        $region102: #{tpu_custom_call.1} parent=95 // pred_check_branch
          %1126 = sbr.rel (%p1124) target = $region104
        $region103: #{tpu_custom_call.1} parent=95 // pred_region
          %s1127 = sand.u32 %s293, 1
          %s1128 = scalar_lea.sflag [#allocation12], %s1127
          %s1129 = sand.u32 %s293, 1
          %s1130 = smul.addr %s1129, 16
          %s1131 = scalar_lea.vmem [#allocation11], %s1130
          %1133 = dma.done %s1128, 256
        $region104: #{tpu_custom_call.1} parent=95 // pred_fallthru
          _
        // Predicated region
        $region105: #{tpu_custom_call.1} parent=95 // pred_check
          %p1134 = pneg %p334
        $region106: #{tpu_custom_call.1} parent=95 // pred_check_branch
          %1136 = sbr.rel (%p1134) target = $region108
        $region107: #{tpu_custom_call.1} parent=95 // pred_region
          %p1137 = scmp.lt.s32.totalorder %s39, 1
          %s1138 = scalar_select %p1137, %s39, 1
          %s1139 = smul.addr %s1138, 8
          %s1140 = scalar_lea.vmem %s12, %s1139
        $region108: #{tpu_custom_call.1} parent=95 // pred_fallthru
          _
        // Predicated region
        $region109: #{tpu_custom_call.1} parent=95 // pred_check
          %p1141 = pneg %p360
        $region110: #{tpu_custom_call.1} parent=95 // pred_check_branch
          %1143 = sbr.rel (%p1141) target = $region112
        $region111: #{tpu_custom_call.1} parent=95 // pred_region
          %p1144 = scmp.lt.s32.totalorder %s39, 1
          %s1145 = scalar_select %p1144, %s39, 1
          %s1146 = smul.addr %s1145, 8
          %s1147 = scalar_lea.vmem %s13, %s1146
        $region112: #{tpu_custom_call.1} parent=95 // pred_fallthru
          _
      $region96: #{tpu_custom_call.1} parent=5 // pred_fallthru
        _
    $region6: #{tpu_custom_call.1} parent=1 // loop_footer
      %s37 = sadd.s32 1, %s33
    $region7: #{tpu_custom_call.1} parent=1 // loop_footer_branch
      %32 = sbr.rel target = $region3
    $region8: #{tpu_custom_call.1} parent=1 // loop_exit
      _
    %1148 = vsyncpa [#allocation3], 1
    %s1149 = scalar_lea.sflag [#allocation3], 1
    %1150 = vsyncpa %s1149, 1
    %1151 = vsyncpa [#allocation6], 1
    %s1152 = scalar_lea.sflag [#allocation6], 1
    %1153 = vsyncpa %s1152, 1
    %1154 = vsyncpa [#allocation9], 1
    %1155 = vsyncpa [#allocation4], 1
    %s1156 = scalar_lea.sflag [#allocation4], 1
    %1157 = vsyncpa %s1156, 1
    %1158 = vsyncpa [#allocation12], 1
    %s1159 = scalar_lea.sflag [#allocation12], 1
    %1160 = vsyncpa %s1159, 1

</llo_original>
